<compile_context>
chip_gen: v7x
topology: tpu7x:2x2x1
jax: 0.10.0
libtpu: 0.0.40
codegen_flags: <defaults>
</compile_context>

<pallas_src>
import functools

import jax
import jax.numpy as jnp
from jax import lax
from jax.experimental import pallas as pl
from jax.experimental.pallas import tpu as pltpu

INPUT_DIM = 256
HIDDEN_DIMS = (128, 64)
NUM_CLASSES = 2
NC_PAD = 8          # classifier rows padded to one sublane group
LN_EPS = 1e-5

TILE_B = 2048       # default batch tile (multiple of 128); a few MiB of VMEM


def _round_up(n, m):
    return (n + m - 1) // m * m


def _cdiv(a, b):
    return (a + b - 1) // b


def _layernorm(h, gamma, beta, stat_w, mxu_stats):
    # Centered (two-pass) LayerNorm.  With mxu_stats the row reductions run on
    # the MXU as narrow (K -> 8) dots against a resident 1/D matrix, removing
    # the per-row XLU lane reductions that were the saturating slot on v6e/v7x.
    if mxu_stats:
        mu = jnp.dot(h, stat_w, preferred_element_type=jnp.float32)[:, :1]
        c = h - mu
        var = jnp.dot(c * c, stat_w, preferred_element_type=jnp.float32)[:, :1]
    else:
        # v5e-friendly path: keep reductions on the VPU/XLU (3 XLUs there, and
        # the 128-wide MXU is already fully occupied by the 256->128 matmul).
        mu = jnp.mean(h, axis=-1, keepdims=True)
        c = h - mu
        var = jnp.mean(c * c, axis=-1, keepdims=True)
    return c * lax.rsqrt(var + LN_EPS) * gamma + beta


def head_kernel(x_ref,
                w1_ref, b1_ref, g1_ref, be1_ref, s1_ref,
                w2_ref, b2_ref, g2_ref, be2_ref, s2_ref,
                w3p_ref, b3_ref,
                out_ref, *, mxu_stats):
    # Block 1: Linear(256 -> 128) + ReLU + Dropout(identity) + LayerNorm(128).
    # x / w1 may be bf16 (halves the dominant HBM stream); MXU accumulates f32.
    h = jnp.dot(x_ref[...], w1_ref[...], preferred_element_type=jnp.float32)
    h = jnp.maximum(h + b1_ref[...], 0.0)
    h = _layernorm(h, g1_ref[...], be1_ref[...], s1_ref[...], mxu_stats)

    # Block 2: Linear(128 -> 64) + ReLU + Dropout(identity) + LayerNorm(64).
    h = jnp.dot(h, w2_ref[...], preferred_element_type=jnp.float32)
    h = jnp.maximum(h + b2_ref[...], 0.0)
    h = _layernorm(h, g2_ref[...], be2_ref[...], s2_ref[...], mxu_stats)

    # Classifier Linear(64 -> NUM_CLASSES), NT-form on the MXU:
    #   logits^T[c, b] = sum_d w3[c, d] * h[b, d]
    # Produces an (NC_PAD, tile_b) result with batch on lanes -> lane-dense,
    # unmasked stores (no (tile_b, 2) masked-store tail, no XLU lane reduce).
    logits_t = lax.dot_general(w3p_ref[...], h, (((1,), (1,)), ((), ())),
                               preferred_element_type=jnp.float32)
    out_ref[...] = (logits_t + b3_ref[...]).astype(out_ref.dtype)


def _choose_tile_b(B, tile_b):
    # Tile must be a multiple of 128 so the (NC_PAD, tile_b) output store is
    # lane-dense.  Cap at ceil(B/2) (rounded up to 128) when B >= 256 so there
    # are always >= 2 grid steps and v7x's second TensorCore gets work.
    t = _round_up(min(tile_b, _round_up(B, 128)), 128)
    if B >= 256:
        t = min(t, _round_up(_cdiv(B, 2), 128))
    return max(t, 128)


def classification_head(x, params, *, tile_b=TILE_B, mxu_stats=True):
    """Fused MLP head.  x: [B, INPUT_DIM] -> logits [B, NUM_CLASSES] (f32).

    Pass a bf16 `x` to stream the dominant operand at half the HBM bytes
    (producer-side cast; no extra HBM pass here).  `mxu_stats=False` keeps the
    LayerNorm reductions on the VPU/XLU (preferred on v5e).
    """
    B = x.shape[0]
    assert x.shape[1] == INPUT_DIM
    tile_b = _choose_tile_b(B, tile_b)
    n_tiles = _cdiv(B, tile_b)          # ragged tail handled by Pallas masking
    b_out = n_tiles * tile_b

    w1 = params["w1"].astype(x.dtype)   # tiny cast; all other math stays f32
    s1 = jnp.full((HIDDEN_DIMS[0], NC_PAD), 1.0 / HIDDEN_DIMS[0], jnp.float32)
    s2 = jnp.full((HIDDEN_DIMS[1], NC_PAD), 1.0 / HIDDEN_DIMS[1], jnp.float32)

    args = (
        x,
        w1, params["b1"], params["g1"], params["be1"], s1,
        params["w2"], params["b2"], params["g2"], params["be2"], s2,
        params["w3p"], params["b3col"],
    )

    def resident(a):
        # Constant index_map: the weight/bias/stat matrix is DMA'd once and
        # stays VMEM-resident across all grid steps.
        return pl.BlockSpec(a.shape, lambda i: (0, 0))

    in_specs = [pl.BlockSpec((tile_b, INPUT_DIM), lambda i: (i, 0))]
    in_specs += [resident(a) for a in args[1:]]
    # Transposed, lane-dense output: batch on the lane axis.
    out_spec = pl.BlockSpec((NC_PAD, tile_b), lambda i: (0, i))

    flops_per_row = 2 * (INPUT_DIM * HIDDEN_DIMS[0]
                         + 2 * HIDDEN_DIMS[0] * NC_PAD
                         + HIDDEN_DIMS[0] * HIDDEN_DIMS[1]
                         + 2 * HIDDEN_DIMS[1] * NC_PAD
                         + HIDDEN_DIMS[1] * NC_PAD)
    bytes_accessed = sum(int(a.size) * a.dtype.itemsize for a in args)
    bytes_accessed += b_out * NC_PAD * 4

    out_t = pl.pallas_call(
        functools.partial(head_kernel, mxu_stats=mxu_stats),
        out_shape=jax.ShapeDtypeStruct((NC_PAD, b_out), jnp.float32),
        grid=(n_tiles,),
        in_specs=in_specs,
        out_specs=out_spec,
        compiler_params=pltpu.CompilerParams(
            # Batch tiles are independent: shard the grid across v7x's 2 TCs.
            dimension_semantics=("parallel",)),
        cost_estimate=pl.CostEstimate(
            flops=flops_per_row * B,
            transcendentals=2 * B,               # two rsqrt per row
            bytes_accessed=bytes_accessed),
    )(*args)

    # (NC_PAD, b_out) -> (B, NUM_CLASSES): tiny wrapper-side slice/transpose.
    return out_t[:NUM_CLASSES, :B].T


def init_params(key):
    """Deterministic synthetic parameters (PyTorch-equivalent init)."""
    ks = jax.random.split(key, 8)

    def lin(k, fan_in, fan_out):
        kw, kb = jax.random.split(k)
        bound = 1.0 / jnp.sqrt(fan_in)
        w = jax.random.uniform(kw, (fan_in, fan_out), jnp.float32, -bound, bound)
        b = jax.random.uniform(kb, (1, fan_out), jnp.float32, -bound, bound)
        return w, b

    w1, b1 = lin(ks[0], INPUT_DIM, HIDDEN_DIMS[0])
    w2, b2 = lin(ks[1], HIDDEN_DIMS[0], HIDDEN_DIMS[1])
    w3, b3 = lin(ks[2], HIDDEN_DIMS[1], NUM_CLASSES)
    # LayerNorm affine params (PyTorch default ones/zeros; perturbed slightly so
    # the op is exercised non-trivially but deterministically).
    g1 = 1.0 + 0.01 * jax.random.normal(ks[3], (1, HIDDEN_DIMS[0]), jnp.float32)
    be1 = 0.01 * jax.random.normal(ks[4], (1, HIDDEN_DIMS[0]), jnp.float32)
    g2 = 1.0 + 0.01 * jax.random.normal(ks[5], (1, HIDDEN_DIMS[1]), jnp.float32)
    be2 = 0.01 * jax.random.normal(ks[6], (1, HIDDEN_DIMS[1]), jnp.float32)
    # Classifier in PyTorch [out, in] layout, zero-padded to NC_PAD rows.
    w3p = jnp.zeros((NC_PAD, HIDDEN_DIMS[1]), jnp.float32).at[:NUM_CLASSES].set(w3.T)
    b3col = jnp.zeros((NC_PAD, 1), jnp.float32).at[:NUM_CLASSES, 0].set(b3[0])
    return dict(w1=w1, b1=b1, g1=g1, be1=be1,
                w2=w2, b2=b2, g2=g2, be2=be2,
                w3p=w3p, b3col=b3col)


def reference(x, p):
    def ln(h, g, b):
        mu = h.mean(-1, keepdims=True)
        var = ((h - mu) ** 2).mean(-1, keepdims=True)
        return (h - mu) / jnp.sqrt(var + LN_EPS) * g + b

    h = jnp.maximum(x @ p["w1"] + p["b1"], 0.0)
    h = ln(h, p["g1"], p["be1"])
    h = jnp.maximum(h @ p["w2"] + p["b2"], 0.0)
    h = ln(h, p["g2"], p["be2"])
    return h @ p["w3p"][:NUM_CLASSES].T + p["b3col"][:NUM_CLASSES, 0]


if __name__ == "__main__":
    key = jax.random.PRNGKey(0)
    kx, kp = jax.random.split(key)
    batch = 8
    x = jax.random.normal(kx, (batch, INPUT_DIM), jnp.float32)
    params = init_params(kp)
    ref = reference(x, params)

    # Exact-semantics (f32) path, MXU-offloaded reductions (v6e/v7x default).
    logits_f32 = classification_head(x, params)
    jax.block_until_ready(logits_f32)
    assert logits_f32.shape == (batch, NUM_CLASSES)
    assert jnp.allclose(logits_f32, ref, atol=2e-3, rtol=2e-3)

    # VPU/XLU LayerNorm-reduction fallback (v5e-preferred path).
    logits_xlu = classification_head(x, params, mxu_stats=False)
    jax.block_until_ready(logits_xlu)
    assert jnp.allclose(logits_xlu, ref, atol=2e-3, rtol=2e-3)

    # bf16-streamed path: producer supplies bf16 x (no wrapper cast/pad pass).
    logits_bf16 = classification_head(x.astype(jnp.bfloat16), params)
    jax.block_until_ready(logits_bf16)
    assert logits_bf16.shape == (batch, NUM_CLASSES)
    assert jnp.allclose(logits_bf16, ref, atol=5e-2, rtol=5e-2)

    print("KERNEL_OK")
</pallas_src>

<mosaic_0001>
module attributes {stable_mosaic.version = 11 : i64} {
  func.func @head_kernel(%arg0: i32, %arg1: memref<128x256xf32, #tpu.memory_space<vmem>>, %arg2: memref<256x128xf32, #tpu.memory_space<vmem>>, %arg3: memref<1x128xf32, #tpu.memory_space<vmem>>, %arg4: memref<1x128xf32, #tpu.memory_space<vmem>>, %arg5: memref<1x128xf32, #tpu.memory_space<vmem>>, %arg6: memref<128x8xf32, #tpu.memory_space<vmem>>, %arg7: memref<128x64xf32, #tpu.memory_space<vmem>>, %arg8: memref<1x64xf32, #tpu.memory_space<vmem>>, %arg9: memref<1x64xf32, #tpu.memory_space<vmem>>, %arg10: memref<1x64xf32, #tpu.memory_space<vmem>>, %arg11: memref<64x8xf32, #tpu.memory_space<vmem>>, %arg12: memref<8x64xf32, #tpu.memory_space<vmem>>, %arg13: memref<8x1xf32, #tpu.memory_space<vmem>>, %arg14: memref<8x128xf32, #tpu.memory_space<vmem>>) attributes {dimension_semantics = [#tpu.dimension_semantics<parallel>], iteration_bounds = array<i64: 1>, scalar_prefetch = 0 : i64, scratch_operands = 0 : i64, tpu.core_type = #tpu.core_type<tc>, window_params = [{transform_indices = @transform_0, window_bounds = array<i64: 128, 256>}, {pipeline_mode = #tpu.pipeline_mode<synchronous>, transform_indices = @transform_1, window_bounds = array<i64: 256, 128>}, {pipeline_mode = #tpu.pipeline_mode<synchronous>, transform_indices = @transform_2, window_bounds = array<i64: 1, 128>}, {pipeline_mode = #tpu.pipeline_mode<synchronous>, transform_indices = @transform_3, window_bounds = array<i64: 1, 128>}, {pipeline_mode = #tpu.pipeline_mode<synchronous>, transform_indices = @transform_4, window_bounds = array<i64: 1, 128>}, {pipeline_mode = #tpu.pipeline_mode<synchronous>, transform_indices = @transform_5, window_bounds = array<i64: 128, 8>}, {pipeline_mode = #tpu.pipeline_mode<synchronous>, transform_indices = @transform_6, window_bounds = array<i64: 128, 64>}, {pipeline_mode = #tpu.pipeline_mode<synchronous>, transform_indices = @transform_7, window_bounds = array<i64: 1, 64>}, {pipeline_mode = #tpu.pipeline_mode<synchronous>, transform_indices = @transform_8, window_bounds = array<i64: 1, 64>}, {pipeline_mode = #tpu.pipeline_mode<synchronous>, transform_indices = @transform_9, window_bounds = array<i64: 1, 64>}, {pipeline_mode = #tpu.pipeline_mode<synchronous>, transform_indices = @transform_10, window_bounds = array<i64: 64, 8>}, {pipeline_mode = #tpu.pipeline_mode<synchronous>, transform_indices = @transform_11, window_bounds = array<i64: 8, 64>}, {pipeline_mode = #tpu.pipeline_mode<synchronous>, transform_indices = @transform_12, window_bounds = array<i64: 8, 1>}, {transform_indices = @transform_13, window_bounds = array<i64: 8, 128>}]} {
    %c0 = arith.constant 0 : index
    %c0_0 = arith.constant 0 : index
    %0 = vector.load %arg1[%c0, %c0_0] : memref<128x256xf32, #tpu.memory_space<vmem>>, vector<128x256xf32>
    %c0_1 = arith.constant 0 : index
    %c0_2 = arith.constant 0 : index
    %1 = vector.load %arg2[%c0_1, %c0_2] : memref<256x128xf32, #tpu.memory_space<vmem>>, vector<256x128xf32>
    %cst = arith.constant dense<0.000000e+00> : vector<128x128xf32>
    %2 = tpu.matmul %0, %1, %cst {dimension_numbers = #tpu.dot_dimension_numbers<[1], [0], [0], [1], [0, 0, 1, 1], [], []>} : vector<128x256xf32>, vector<256x128xf32>, vector<128x128xf32> -> vector<128x128xf32>
    %c0_3 = arith.constant 0 : index
    %c0_4 = arith.constant 0 : index
    %3 = vector.load %arg3[%c0_3, %c0_4] : memref<1x128xf32, #tpu.memory_space<vmem>>, vector<1x128xf32>
    %4 = vector.broadcast %3 : vector<1x128xf32> to vector<128x128xf32>
    %5 = arith.addf %2, %4 : vector<128x128xf32>
    %cst_5 = arith.constant 0.000000e+00 : f32
    %6 = vector.broadcast %cst_5 : f32 to vector<128x128xf32>
    %7 = arith.maximumf %5, %6 : vector<128x128xf32>
    %c0_6 = arith.constant 0 : index
    %c0_7 = arith.constant 0 : index
    %8 = vector.load %arg4[%c0_6, %c0_7] : memref<1x128xf32, #tpu.memory_space<vmem>>, vector<1x128xf32>
    %c0_8 = arith.constant 0 : index
    %c0_9 = arith.constant 0 : index
    %9 = vector.load %arg5[%c0_8, %c0_9] : memref<1x128xf32, #tpu.memory_space<vmem>>, vector<1x128xf32>
    %c0_10 = arith.constant 0 : index
    %c0_11 = arith.constant 0 : index
    %10 = vector.load %arg6[%c0_10, %c0_11] : memref<128x8xf32, #tpu.memory_space<vmem>>, vector<128x8xf32>
    %cst_12 = arith.constant dense<0.000000e+00> : vector<128x8xf32>
    %11 = tpu.matmul %7, %10, %cst_12 {dimension_numbers = #tpu.dot_dimension_numbers<[1], [0], [0], [1], [0, 0, 1, 1], [], []>} : vector<128x128xf32>, vector<128x8xf32>, vector<128x8xf32> -> vector<128x8xf32>
    %12 = vector.extract_strided_slice %11 {offsets = [0, 0], sizes = [128, 1], strides = [1, 1]} : vector<128x8xf32> to vector<128x1xf32>
    %13 = vector.broadcast %12 : vector<128x1xf32> to vector<128x128xf32>
    %14 = arith.subf %7, %13 : vector<128x128xf32>
    %15 = arith.mulf %14, %14 : vector<128x128xf32>
    %cst_13 = arith.constant dense<0.000000e+00> : vector<128x8xf32>
    %16 = tpu.matmul %15, %10, %cst_13 {dimension_numbers = #tpu.dot_dimension_numbers<[1], [0], [0], [1], [0, 0, 1, 1], [], []>} : vector<128x128xf32>, vector<128x8xf32>, vector<128x8xf32> -> vector<128x8xf32>
    %17 = vector.extract_strided_slice %16 {offsets = [0, 0], sizes = [128, 1], strides = [1, 1]} : vector<128x8xf32> to vector<128x1xf32>
    %cst_14 = arith.constant 9.99999974E-6 : f32
    %18 = vector.broadcast %cst_14 : f32 to vector<128x1xf32>
    %19 = arith.addf %17, %18 : vector<128x1xf32>
    %20 = math.rsqrt %19 : vector<128x1xf32>
    %21 = vector.broadcast %20 : vector<128x1xf32> to vector<128x128xf32>
    %22 = arith.mulf %14, %21 : vector<128x128xf32>
    %23 = vector.broadcast %8 : vector<1x128xf32> to vector<128x128xf32>
    %24 = arith.mulf %22, %23 : vector<128x128xf32>
    %25 = vector.broadcast %9 : vector<1x128xf32> to vector<128x128xf32>
    %26 = arith.addf %24, %25 : vector<128x128xf32>
    %c0_15 = arith.constant 0 : index
    %c0_16 = arith.constant 0 : index
    %27 = vector.load %arg7[%c0_15, %c0_16] : memref<128x64xf32, #tpu.memory_space<vmem>>, vector<128x64xf32>
    %cst_17 = arith.constant dense<0.000000e+00> : vector<128x64xf32>
    %28 = tpu.matmul %26, %27, %cst_17 {dimension_numbers = #tpu.dot_dimension_numbers<[1], [0], [0], [1], [0, 0, 1, 1], [], []>} : vector<128x128xf32>, vector<128x64xf32>, vector<128x64xf32> -> vector<128x64xf32>
    %c0_18 = arith.constant 0 : index
    %c0_19 = arith.constant 0 : index
    %29 = vector.load %arg8[%c0_18, %c0_19] : memref<1x64xf32, #tpu.memory_space<vmem>>, vector<1x64xf32>
    %30 = vector.broadcast %29 : vector<1x64xf32> to vector<128x64xf32>
    %31 = arith.addf %28, %30 : vector<128x64xf32>
    %cst_20 = arith.constant 0.000000e+00 : f32
    %32 = vector.broadcast %cst_20 : f32 to vector<128x64xf32>
    %33 = arith.maximumf %31, %32 : vector<128x64xf32>
    %c0_21 = arith.constant 0 : index
    %c0_22 = arith.constant 0 : index
    %34 = vector.load %arg9[%c0_21, %c0_22] : memref<1x64xf32, #tpu.memory_space<vmem>>, vector<1x64xf32>
    %c0_23 = arith.constant 0 : index
    %c0_24 = arith.constant 0 : index
    %35 = vector.load %arg10[%c0_23, %c0_24] : memref<1x64xf32, #tpu.memory_space<vmem>>, vector<1x64xf32>
    %c0_25 = arith.constant 0 : index
    %c0_26 = arith.constant 0 : index
    %36 = vector.load %arg11[%c0_25, %c0_26] : memref<64x8xf32, #tpu.memory_space<vmem>>, vector<64x8xf32>
    %cst_27 = arith.constant dense<0.000000e+00> : vector<128x8xf32>
    %37 = tpu.matmul %33, %36, %cst_27 {dimension_numbers = #tpu.dot_dimension_numbers<[1], [0], [0], [1], [0, 0, 1, 1], [], []>} : vector<128x64xf32>, vector<64x8xf32>, vector<128x8xf32> -> vector<128x8xf32>
    %38 = vector.extract_strided_slice %37 {offsets = [0, 0], sizes = [128, 1], strides = [1, 1]} : vector<128x8xf32> to vector<128x1xf32>
    %39 = vector.broadcast %38 : vector<128x1xf32> to vector<128x64xf32>
    %40 = arith.subf %33, %39 : vector<128x64xf32>
    %41 = arith.mulf %40, %40 : vector<128x64xf32>
    %cst_28 = arith.constant dense<0.000000e+00> : vector<128x8xf32>
    %42 = tpu.matmul %41, %36, %cst_28 {dimension_numbers = #tpu.dot_dimension_numbers<[1], [0], [0], [1], [0, 0, 1, 1], [], []>} : vector<128x64xf32>, vector<64x8xf32>, vector<128x8xf32> -> vector<128x8xf32>
    %43 = vector.extract_strided_slice %42 {offsets = [0, 0], sizes = [128, 1], strides = [1, 1]} : vector<128x8xf32> to vector<128x1xf32>
    %cst_29 = arith.constant 9.99999974E-6 : f32
    %44 = vector.broadcast %cst_29 : f32 to vector<128x1xf32>
    %45 = arith.addf %43, %44 : vector<128x1xf32>
    %46 = math.rsqrt %45 : vector<128x1xf32>
    %47 = vector.broadcast %46 : vector<128x1xf32> to vector<128x64xf32>
    %48 = arith.mulf %40, %47 : vector<128x64xf32>
    %49 = vector.broadcast %34 : vector<1x64xf32> to vector<128x64xf32>
    %50 = arith.mulf %48, %49 : vector<128x64xf32>
    %51 = vector.broadcast %35 : vector<1x64xf32> to vector<128x64xf32>
    %52 = arith.addf %50, %51 : vector<128x64xf32>
    %c0_30 = arith.constant 0 : index
    %c0_31 = arith.constant 0 : index
    %53 = vector.load %arg12[%c0_30, %c0_31] : memref<8x64xf32, #tpu.memory_space<vmem>>, vector<8x64xf32>
    %cst_32 = arith.constant dense<0.000000e+00> : vector<8x128xf32>
    %54 = tpu.matmul %53, %52, %cst_32 {dimension_numbers = #tpu.dot_dimension_numbers<[1], [1], [0], [0], [0, 0, 1, 0], [], []>} : vector<8x64xf32>, vector<128x64xf32>, vector<8x128xf32> -> vector<8x128xf32>
    %c0_33 = arith.constant 0 : index
    %c0_34 = arith.constant 0 : index
    %55 = vector.load %arg13[%c0_33, %c0_34] : memref<8x1xf32, #tpu.memory_space<vmem>>, vector<8x1xf32>
    %56 = vector.broadcast %55 : vector<8x1xf32> to vector<8x128xf32>
    %57 = arith.addf %54, %56 : vector<8x128xf32>
    %c0_35 = arith.constant 0 : index
    %c0_36 = arith.constant 0 : index
    %58 = vector.load %arg14[%c0_35, %c0_36] : memref<8x128xf32, #tpu.memory_space<vmem>>, vector<8x128xf32>
    tpu.vector_store %arg14[%c0_35, %c0_36], %57 {strides = array<i32>} : memref<8x128xf32, #tpu.memory_space<vmem>>, vector<8x128xf32>,
    return
  }
  func.func @transform_0(%arg0: i32) -> (i32, i32) {
    %c0_i32 = arith.constant 0 : i32
    %c0_i32_0 = arith.constant 0 : i32
    return %arg0, %c0_i32 : i32, i32
  }
  func.func @transform_1(%arg0: i32) -> (i32, i32) {
    %c0_i32 = arith.constant 0 : i32
    %c0_i32_0 = arith.constant 0 : i32
    %c0_i32_1 = arith.constant 0 : i32
    return %c0_i32, %c0_i32_0 : i32, i32
  }
  func.func @transform_2(%arg0: i32) -> (i32, i32) {
    %c0_i32 = arith.constant 0 : i32
    %c0_i32_0 = arith.constant 0 : i32
    %c0_i32_1 = arith.constant 0 : i32
    return %c0_i32, %c0_i32_0 : i32, i32
  }
  func.func @transform_3(%arg0: i32) -> (i32, i32) {
    %c0_i32 = arith.constant 0 : i32
    %c0_i32_0 = arith.constant 0 : i32
    %c0_i32_1 = arith.constant 0 : i32
    return %c0_i32, %c0_i32_0 : i32, i32
  }
  func.func @transform_4(%arg0: i32) -> (i32, i32) {
    %c0_i32 = arith.constant 0 : i32
    %c0_i32_0 = arith.constant 0 : i32
    %c0_i32_1 = arith.constant 0 : i32
    return %c0_i32, %c0_i32_0 : i32, i32
  }
  func.func @transform_5(%arg0: i32) -> (i32, i32) {
    %c0_i32 = arith.constant 0 : i32
    %c0_i32_0 = arith.constant 0 : i32
    %c0_i32_1 = arith.constant 0 : i32
    return %c0_i32, %c0_i32_0 : i32, i32
  }
  func.func @transform_6(%arg0: i32) -> (i32, i32) {
    %c0_i32 = arith.constant 0 : i32
    %c0_i32_0 = arith.constant 0 : i32
    %c0_i32_1 = arith.constant 0 : i32
    return %c0_i32, %c0_i32_0 : i32, i32
  }
  func.func @transform_7(%arg0: i32) -> (i32, i32) {
    %c0_i32 = arith.constant 0 : i32
    %c0_i32_0 = arith.constant 0 : i32
    %c0_i32_1 = arith.constant 0 : i32
    return %c0_i32, %c0_i32_0 : i32, i32
  }
  func.func @transform_8(%arg0: i32) -> (i32, i32) {
    %c0_i32 = arith.constant 0 : i32
    %c0_i32_0 = arith.constant 0 : i32
    %c0_i32_1 = arith.constant 0 : i32
    return %c0_i32, %c0_i32_0 : i32, i32
  }
  func.func @transform_9(%arg0: i32) -> (i32, i32) {
    %c0_i32 = arith.constant 0 : i32
    %c0_i32_0 = arith.constant 0 : i32
    %c0_i32_1 = arith.constant 0 : i32
    return %c0_i32, %c0_i32_0 : i32, i32
  }
  func.func @transform_10(%arg0: i32) -> (i32, i32) {
    %c0_i32 = arith.constant 0 : i32
    %c0_i32_0 = arith.constant 0 : i32
    %c0_i32_1 = arith.constant 0 : i32
    return %c0_i32, %c0_i32_0 : i32, i32
  }
  func.func @transform_11(%arg0: i32) -> (i32, i32) {
    %c0_i32 = arith.constant 0 : i32
    %c0_i32_0 = arith.constant 0 : i32
    %c0_i32_1 = arith.constant 0 : i32
    return %c0_i32, %c0_i32_0 : i32, i32
  }
  func.func @transform_12(%arg0: i32) -> (i32, i32) {
    %c0_i32 = arith.constant 0 : i32
    %c0_i32_0 = arith.constant 0 : i32
    %c0_i32_1 = arith.constant 0 : i32
    return %c0_i32, %c0_i32_0 : i32, i32
  }
  func.func @transform_13(%arg0: i32) -> (i32, i32) {
    %c0_i32 = arith.constant 0 : i32
    %c0_i32_0 = arith.constant 0 : i32
    return %c0_i32, %arg0 : i32, i32
  }
}

</mosaic_0001>

<llo_original>
// kernel: tpu_custom_call.1
$region0: #{tpu_custom_call.1}
  #allocation0 [shape = 'u32[]', space=smem, size = 0x4, offset = 0x4, fixed_abs, tag = 'smem constant byte address 0x4 - core index']
  #allocation1 [shape = 'u32[144,128]{1,0:T(1,128)}', space=vmem, size = 0x12000, scoped, tag = 'internal scratch']
  %s0 = inlined_call_operand.vmem [shape: f32[8,256], index: 0, kind: input, shape index: {}]
  %s1 = inlined_call_operand.vmem [shape: f32[256,128], index: 1, kind: input, shape index: {}]
  %s2 = inlined_call_operand.vmem [shape: f32[1,128], index: 2, kind: input, shape index: {}]
  %s3 = inlined_call_operand.vmem [shape: f32[1,128], index: 3, kind: input, shape index: {}]
  %s4 = inlined_call_operand.vmem [shape: f32[1,128], index: 4, kind: input, shape index: {}]
  %s5 = inlined_call_operand.vmem [shape: f32[128,8], index: 5, kind: input, shape index: {}]
  %s6 = inlined_call_operand.vmem [shape: f32[128,64], index: 6, kind: input, shape index: {}]
  %s7 = inlined_call_operand.vmem [shape: f32[1,64], index: 7, kind: input, shape index: {}]
  %s8 = inlined_call_operand.vmem [shape: f32[1,64], index: 8, kind: input, shape index: {}]
  %s9 = inlined_call_operand.vmem [shape: f32[1,64], index: 9, kind: input, shape index: {}]
  %s10 = inlined_call_operand.vmem [shape: f32[64,8], index: 10, kind: input, shape index: {}]
  %s11 = inlined_call_operand.vmem [shape: f32[8,64], index: 11, kind: input, shape index: {}]
  %s12 = inlined_call_operand.vmem [shape: f32[8,1], index: 12, kind: input, shape index: {}]
  %s13 = inlined_call_operand.hbm [shape: f32[8,128], index: 13, kind: output, shape index: {}]
  %s14 = sld [smem:[#allocation0]]
  $region62: #{tpu_custom_call.1} parent=0
    _
  %s16 = ssub.s32 1, %s14
  %s17 = scalar_select 0, %s16, %s14
  $region1: #{tpu_custom_call.1} parent=0
    #allocation2 [shape = 'u8[4096]{0}', space=vmem, size = 0x1000, scoped, tag = 'output window, operand 0, single buffered']
    #allocation3 [shape = 's32[1]{0}', space=sflag, size = 0x4, scoped, tag = 'scoped memory for tpu_custom_call.1']
    %18 = vsyncpa [#allocation3], 0
    // Predicated region
    $region2: #{tpu_custom_call.1} parent=1 // pred_check
      _
    $region3: #{tpu_custom_call.1} parent=1 // pred_check_branch
      %20 = sbr.rel (0) target = $region5
    $region4: #{tpu_custom_call.1} parent=1 // pred_region
      _
    $region5: #{tpu_custom_call.1} parent=1 // pred_fallthru
      _
    // Predicated region
    $region6: #{tpu_custom_call.1} parent=1 // pred_check
      _
    $region7: #{tpu_custom_call.1} parent=1 // pred_check_branch
      %22 = sbr.rel (0) target = $region9
    $region8: #{tpu_custom_call.1} parent=1 // pred_region
      _
    $region9: #{tpu_custom_call.1} parent=1 // pred_fallthru
      _
    // Predicated region
    $region10: #{tpu_custom_call.1} parent=1 // pred_check
      _
    $region11: #{tpu_custom_call.1} parent=1 // pred_check_branch
      %24 = sbr.rel (0) target = $region13
    $region12: #{tpu_custom_call.1} parent=1 // pred_region
      _
    $region13: #{tpu_custom_call.1} parent=1 // pred_fallthru
      _
    // Predicated region
    $region14: #{tpu_custom_call.1} parent=1 // pred_check
      _
    $region15: #{tpu_custom_call.1} parent=1 // pred_check_branch
      %26 = sbr.rel (0) target = $region17
    $region16: #{tpu_custom_call.1} parent=1 // pred_region
      _
    $region17: #{tpu_custom_call.1} parent=1 // pred_fallthru
      _
    // Predicated region
    $region18: #{tpu_custom_call.1} parent=1 // pred_check
      _
    $region19: #{tpu_custom_call.1} parent=1 // pred_check_branch
      %28 = sbr.rel (0) target = $region21
    $region20: #{tpu_custom_call.1} parent=1 // pred_region
      _
    $region21: #{tpu_custom_call.1} parent=1 // pred_fallthru
      _
    // Predicated region
    $region22: #{tpu_custom_call.1} parent=1 // pred_check
      _
    $region23: #{tpu_custom_call.1} parent=1 // pred_check_branch
      %30 = sbr.rel (0) target = $region25
    $region24: #{tpu_custom_call.1} parent=1 // pred_region
      _
    $region25: #{tpu_custom_call.1} parent=1 // pred_fallthru
      _
    // Predicated region
    $region26: #{tpu_custom_call.1} parent=1 // pred_check
      _
    $region27: #{tpu_custom_call.1} parent=1 // pred_check_branch
      %32 = sbr.rel (0) target = $region29
    $region28: #{tpu_custom_call.1} parent=1 // pred_region
      _
    $region29: #{tpu_custom_call.1} parent=1 // pred_fallthru
      _
    // Predicated region
    $region30: #{tpu_custom_call.1} parent=1 // pred_check
      _
    $region31: #{tpu_custom_call.1} parent=1 // pred_check_branch
      %34 = sbr.rel (0) target = $region33
    $region32: #{tpu_custom_call.1} parent=1 // pred_region
      _
    $region33: #{tpu_custom_call.1} parent=1 // pred_fallthru
      _
    // Predicated region
    $region34: #{tpu_custom_call.1} parent=1 // pred_check
      _
    $region35: #{tpu_custom_call.1} parent=1 // pred_check_branch
      %36 = sbr.rel (0) target = $region37
    $region36: #{tpu_custom_call.1} parent=1 // pred_region
      _
    $region37: #{tpu_custom_call.1} parent=1 // pred_fallthru
      _
    // Predicated region
    $region38: #{tpu_custom_call.1} parent=1 // pred_check
      _
    $region39: #{tpu_custom_call.1} parent=1 // pred_check_branch
      %38 = sbr.rel (0) target = $region41
    $region40: #{tpu_custom_call.1} parent=1 // pred_region
      _
    $region41: #{tpu_custom_call.1} parent=1 // pred_fallthru
      _
    // Predicated region
    $region42: #{tpu_custom_call.1} parent=1 // pred_check
      _
    $region43: #{tpu_custom_call.1} parent=1 // pred_check_branch
      %40 = sbr.rel (0) target = $region45
    $region44: #{tpu_custom_call.1} parent=1 // pred_region
      _
    $region45: #{tpu_custom_call.1} parent=1 // pred_fallthru
      _
    // Predicated region
    $region46: #{tpu_custom_call.1} parent=1 // pred_check
      _
    $region47: #{tpu_custom_call.1} parent=1 // pred_check_branch
      %42 = sbr.rel (0) target = $region49
    $region48: #{tpu_custom_call.1} parent=1 // pred_region
      _
    $region49: #{tpu_custom_call.1} parent=1 // pred_fallthru
      _
    // Predicated region
    $region50: #{tpu_custom_call.1} parent=1 // pred_check
      _
    $region51: #{tpu_custom_call.1} parent=1 // pred_check_branch
      %44 = sbr.rel (0) target = $region53
    $region52: #{tpu_custom_call.1} parent=1 // pred_region
      _
    $region53: #{tpu_custom_call.1} parent=1 // pred_fallthru
      _
    %v45 = vld [vmem:[%s0] sm:$0xff]
    %v46 = vld [vmem:[%s0 + $0x8] sm:$0xff]
    %v47 = vld [vmem:[%s0 + $0x10] sm:$0xff]
    %v48 = vld [vmem:[%s0 + $0x18] sm:$0xff]
    %v49 = vld [vmem:[%s0 + $0x20] sm:$0xff]
    %v50 = vld [vmem:[%s0 + $0x28] sm:$0xff]
    %v51 = vld [vmem:[%s0 + $0x30] sm:$0xff]
    %v52 = vld [vmem:[%s0 + $0x38] sm:$0xff]
    %v53 = vld [vmem:[%s0 + $0x40] sm:$0xff]
    %v54 = vld [vmem:[%s0 + $0x48] sm:$0xff]
    %v55 = vld [vmem:[%s0 + $0x50] sm:$0xff]
    %v56 = vld [vmem:[%s0 + $0x58] sm:$0xff]
    %v57 = vld [vmem:[%s0 + $0x60] sm:$0xff]
    %v58 = vld [vmem:[%s0 + $0x68] sm:$0xff]
    %v59 = vld [vmem:[%s0 + $0x70] sm:$0xff]
    %v60 = vld [vmem:[%s0 + $0x78] sm:$0xff]
    %v61 = vld [vmem:[%s0 + $0x80] sm:$0xff]
    %v62 = vld [vmem:[%s0 + $0x88] sm:$0xff]
    %v63 = vld [vmem:[%s0 + $0x90] sm:$0xff]
    %v64 = vld [vmem:[%s0 + $0x98] sm:$0xff]
    %v65 = vld [vmem:[%s0 + $0xa0] sm:$0xff]
    %v66 = vld [vmem:[%s0 + $0xa8] sm:$0xff]
    %v67 = vld [vmem:[%s0 + $0xb0] sm:$0xff]
    %v68 = vld [vmem:[%s0 + $0xb8] sm:$0xff]
    %v69 = vld [vmem:[%s0 + $0xc0] sm:$0xff]
    %v70 = vld [vmem:[%s0 + $0xc8] sm:$0xff]
    %v71 = vld [vmem:[%s0 + $0xd0] sm:$0xff]
    %v72 = vld [vmem:[%s0 + $0xd8] sm:$0xff]
    %v73 = vld [vmem:[%s0 + $0xe0] sm:$0xff]
    %v74 = vld [vmem:[%s0 + $0xe8] sm:$0xff]
    %v75 = vld [vmem:[%s0 + $0xf0] sm:$0xff]
    %v76 = vld [vmem:[%s0 + $0xf8] sm:$0xff]
    %v77 = vld [vmem:[%s1] sm:$0xff]
    %v78 = vld [vmem:[%s1 + $0x8] sm:$0xff]
    %v79 = vld [vmem:[%s1 + $0x10] sm:$0xff]
    %v80 = vld [vmem:[%s1 + $0x18] sm:$0xff]
    %v81 = vld [vmem:[%s1 + $0x20] sm:$0xff]
    %v82 = vld [vmem:[%s1 + $0x28] sm:$0xff]
    %v83 = vld [vmem:[%s1 + $0x30] sm:$0xff]
    %v84 = vld [vmem:[%s1 + $0x38] sm:$0xff]
    %v85 = vld [vmem:[%s1 + $0x40] sm:$0xff]
    %v86 = vld [vmem:[%s1 + $0x48] sm:$0xff]
    %v87 = vld [vmem:[%s1 + $0x50] sm:$0xff]
    %v88 = vld [vmem:[%s1 + $0x58] sm:$0xff]
    %v89 = vld [vmem:[%s1 + $0x60] sm:$0xff]
    %v90 = vld [vmem:[%s1 + $0x68] sm:$0xff]
    %v91 = vld [vmem:[%s1 + $0x70] sm:$0xff]
    %v92 = vld [vmem:[%s1 + $0x78] sm:$0xff]
    %v93 = vld [vmem:[%s1 + $0x80] sm:$0xff]
    %v94 = vld [vmem:[%s1 + $0x88] sm:$0xff]
    %v95 = vld [vmem:[%s1 + $0x90] sm:$0xff]
    %v96 = vld [vmem:[%s1 + $0x98] sm:$0xff]
    %v97 = vld [vmem:[%s1 + $0xa0] sm:$0xff]
    %v98 = vld [vmem:[%s1 + $0xa8] sm:$0xff]
    %v99 = vld [vmem:[%s1 + $0xb0] sm:$0xff]
    %v100 = vld [vmem:[%s1 + $0xb8] sm:$0xff]
    %v101 = vld [vmem:[%s1 + $0xc0] sm:$0xff]
    %v102 = vld [vmem:[%s1 + $0xc8] sm:$0xff]
    %v103 = vld [vmem:[%s1 + $0xd0] sm:$0xff]
    %v104 = vld [vmem:[%s1 + $0xd8] sm:$0xff]
    %v105 = vld [vmem:[%s1 + $0xe0] sm:$0xff]
    %v106 = vld [vmem:[%s1 + $0xe8] sm:$0xff]
    %v107 = vld [vmem:[%s1 + $0xf0] sm:$0xff]
    %v108 = vld [vmem:[%s1 + $0xf8] sm:$0xff]
    %v109 = vld [vmem:[%s2] sm:$0x1]
    %v111 = vlaneseq
    %v112 = vshrl.u32 %v111, 7
    %v113 = vsub.s32 0, %v112
    %v114 = vrot.slane %v109, %v113
    %116 = vmatprep.subr.mxu0 0.0
    %117 = vmatpush1.msra.mxu0 %v77
    %118 = vmatprep.subr.mxu0 0.0
    %119 = vmatpush1.msra.mxu0 %v78
    %120 = vmatprep.subr.mxu0 0.0
    %121 = vmatpush1.msra.mxu0 %v79
    %122 = vmatprep.subr.mxu0 0.0
    %123 = vmatpush1.msra.mxu0 %v80
    %124 = vmatprep.subr.mxu0 0.0
    %125 = vmatpush1.msra.mxu0 %v81
    %126 = vmatprep.subr.mxu0 0.0
    %127 = vmatpush1.msra.mxu0 %v82
    %128 = vmatprep.subr.mxu0 0.0
    %129 = vmatpush1.msra.mxu0 %v83
    %130 = vmatprep.subr.mxu0 0.0
    %131 = vmatpush1.msra.mxu0 %v84
    %132 = vmatprep.subr.mxu0 0.0
    %133 = vmatpush1.msra.mxu0 %v85
    %134 = vmatprep.subr.mxu0 0.0
    %135 = vmatpush1.msra.mxu0 %v86
    %136 = vmatprep.subr.mxu0 0.0
    %137 = vmatpush1.msra.mxu0 %v87
    %138 = vmatprep.subr.mxu0 0.0
    %139 = vmatpush1.msra.mxu0 %v88
    %140 = vmatprep.subr.mxu0 0.0
    %141 = vmatpush1.msra.mxu0 %v89
    %142 = vmatprep.subr.mxu0 0.0
    %143 = vmatpush1.msra.mxu0 %v90
    %144 = vmatprep.subr.mxu0 0.0
    %145 = vmatpush1.msra.mxu0 %v91
    %146 = vmatprep.subr.mxu0 0.0
    %147 = vmatpush1.msra.mxu0 %v92
    %148 = vmatprep.subr.mxu0 0.0
    %149 = vmatpush1.msra.mxu0 %v93
    %150 = vmatprep.subr.mxu0 0.0
    %151 = vmatpush1.msra.mxu0 %v94
    %152 = vmatprep.subr.mxu0 0.0
    %153 = vmatpush1.msra.mxu0 %v95
    %154 = vmatprep.subr.mxu0 0.0
    %155 = vmatpush1.msra.mxu0 %v96
    %156 = vmatprep.subr.mxu0 0.0
    %157 = vmatpush1.msra.mxu0 %v97
    %158 = vmatprep.subr.mxu0 0.0
    %159 = vmatpush1.msra.mxu0 %v98
    %160 = vmatprep.subr.mxu0 0.0
    %161 = vmatpush1.msra.mxu0 %v99
    %162 = vmatprep.subr.mxu0 0.0
    %163 = vmatpush1.msra.mxu0 %v100
    %164 = vmatprep.subr.mxu0 0.0
    %165 = vmatpush1.msra.mxu0 %v101
    %166 = vmatprep.subr.mxu0 0.0
    %167 = vmatpush1.msra.mxu0 %v102
    %168 = vmatprep.subr.mxu0 0.0
    %169 = vmatpush1.msra.mxu0 %v103
    %170 = vmatprep.subr.mxu0 0.0
    %171 = vmatpush1.msra.mxu0 %v104
    %172 = vmatprep.subr.mxu0 0.0
    %173 = vmatpush1.msra.mxu0 %v105
    %174 = vmatprep.subr.mxu0 0.0
    %175 = vmatpush1.msra.mxu0 %v106
    %176 = vmatprep.subr.mxu0 0.0
    %177 = vmatpush1.msra.mxu0 %v107
    %178 = vmatprep.subr.mxu0 0.0
    %179 = vmatpush1.msra.mxu0 %v108
    %180 = vmatprep.mubr.f32.mxu0 %v46
    %181 = vmatmul.mubr.f32.gmra.mrb[0].mxu0 %v45
    %v182 = vpop.f32.mrb[0].mxu0
    %v183 = vadd.f32 %v114, %v182
    %v184 = vpop.f32.mrb[0].mxu0
    %185 = vmatprep.mubr.f32.mxu0 %v48
    %186 = vmatmul.mubr.f32.gmra.mrb[0].mxu0 %v47
    %v187 = vpop.f32.mrb[0].mxu0
    %v188 = vadd.f32 %v114, %v187
    %v189 = vpop.f32.mrb[0].mxu0
    %190 = vmatprep.mubr.f32.mxu0 %v50
    %191 = vmatmul.mubr.f32.gmra.mrb[0].mxu0 %v49
    %v192 = vpop.f32.mrb[0].mxu0
    %v193 = vadd.f32 %v114, %v192
    %v194 = vpop.f32.mrb[0].mxu0
    %195 = vmatprep.mubr.f32.mxu0 %v52
    %196 = vmatmul.mubr.f32.gmra.mrb[0].mxu0 %v51
    %v197 = vpop.f32.mrb[0].mxu0
    %v198 = vadd.f32 %v114, %v197
    %v199 = vpop.f32.mrb[0].mxu0
    %200 = vmatprep.mubr.f32.mxu0 %v54
    %201 = vmatmul.mubr.f32.gmra.mrb[0].mxu0 %v53
    %v202 = vpop.f32.mrb[0].mxu0
    %v203 = vadd.f32 %v114, %v202
    %v204 = vpop.f32.mrb[0].mxu0
    %205 = vmatprep.mubr.f32.mxu0 %v56
    %206 = vmatmul.mubr.f32.gmra.mrb[0].mxu0 %v55
    %v207 = vpop.f32.mrb[0].mxu0
    %v208 = vadd.f32 %v114, %v207
    %v209 = vpop.f32.mrb[0].mxu0
    %210 = vmatprep.mubr.f32.mxu0 %v58
    %211 = vmatmul.mubr.f32.gmra.mrb[0].mxu0 %v57
    %v212 = vpop.f32.mrb[0].mxu0
    %v213 = vadd.f32 %v114, %v212
    %v214 = vpop.f32.mrb[0].mxu0
    %215 = vmatprep.mubr.f32.mxu0 %v60
    %216 = vmatmul.mubr.f32.gmra.mrb[0].mxu0 %v59
    %v217 = vpop.f32.mrb[0].mxu0
    %v218 = vadd.f32 %v114, %v217
    %v219 = vpop.f32.mrb[0].mxu0
    %220 = vmatprep.mubr.f32.mxu0 %v62
    %221 = vmatmul.mubr.f32.gmra.mrb[0].mxu0 %v61
    %v222 = vpop.f32.mrb[0].mxu0
    %v223 = vadd.f32 %v114, %v222
    %v224 = vpop.f32.mrb[0].mxu0
    %225 = vmatprep.mubr.f32.mxu0 %v64
    %226 = vmatmul.mubr.f32.gmra.mrb[0].mxu0 %v63
    %v227 = vpop.f32.mrb[0].mxu0
    %v228 = vadd.f32 %v114, %v227
    %v229 = vpop.f32.mrb[0].mxu0
    %230 = vmatprep.mubr.f32.mxu0 %v66
    %231 = vmatmul.mubr.f32.gmra.mrb[0].mxu0 %v65
    %v232 = vpop.f32.mrb[0].mxu0
    %v233 = vadd.f32 %v114, %v232
    %v234 = vpop.f32.mrb[0].mxu0
    %235 = vmatprep.mubr.f32.mxu0 %v68
    %236 = vmatmul.mubr.f32.gmra.mrb[0].mxu0 %v67
    %v237 = vpop.f32.mrb[0].mxu0
    %v238 = vadd.f32 %v114, %v237
    %v239 = vpop.f32.mrb[0].mxu0
    %240 = vmatprep.mubr.f32.mxu0 %v70
    %241 = vmatmul.mubr.f32.gmra.mrb[0].mxu0 %v69
    %v242 = vpop.f32.mrb[0].mxu0
    %v243 = vadd.f32 %v114, %v242
    %v244 = vpop.f32.mrb[0].mxu0
    %245 = vmatprep.mubr.f32.mxu0 %v72
    %246 = vmatmul.mubr.f32.gmra.mrb[0].mxu0 %v71
    %v247 = vpop.f32.mrb[0].mxu0
    %v248 = vadd.f32 %v114, %v247
    %v249 = vpop.f32.mrb[0].mxu0
    %250 = vmatprep.mubr.f32.mxu0 %v74
    %251 = vmatmul.mubr.f32.gmra.mrb[0].mxu0 %v73
    %v252 = vpop.f32.mrb[0].mxu0
    %v253 = vadd.f32 %v114, %v252
    %v254 = vpop.f32.mrb[0].mxu0
    %255 = vmatprep.mubr.f32.mxu0 %v76
    %256 = vmatmul.mubr.f32.gmra.mrb[0].mxu0 %v75
    %v257 = vpop.f32.mrb[0].mxu0
    %v258 = vadd.f32 %v114, %v257
    %v259 = vpop.f32.mrb[0].mxu0
    %260 = vdwg.mxu0
    %v261 = vmax.f32 %v183, 0.0
    %v262 = vmax.f32 %v188, 0.0
    %v263 = vmax.f32 %v193, 0.0
    %v264 = vmax.f32 %v198, 0.0
    %v265 = vmax.f32 %v203, 0.0
    %v266 = vmax.f32 %v208, 0.0
    %v267 = vmax.f32 %v213, 0.0
    %v268 = vmax.f32 %v218, 0.0
    %v269 = vmax.f32 %v223, 0.0
    %v270 = vmax.f32 %v228, 0.0
    %v271 = vmax.f32 %v233, 0.0
    %v272 = vmax.f32 %v238, 0.0
    %v273 = vmax.f32 %v243, 0.0
    %v274 = vmax.f32 %v248, 0.0
    %v275 = vmax.f32 %v253, 0.0
    %v276 = vmax.f32 %v258, 0.0
    %v277 = vld [vmem:[%s3] sm:$0x1]
    %v278 = vld [vmem:[%s4] sm:$0x1]
    %v279 = vld [vmem:[%s5] sm:$0xff]
    %v280 = vld [vmem:[%s5 + $0x8] sm:$0xff]
    %v281 = vld [vmem:[%s5 + $0x10] sm:$0xff]
    %v282 = vld [vmem:[%s5 + $0x18] sm:$0xff]
    %v283 = vld [vmem:[%s5 + $0x20] sm:$0xff]
    %v284 = vld [vmem:[%s5 + $0x28] sm:$0xff]
    %v285 = vld [vmem:[%s5 + $0x30] sm:$0xff]
    %v286 = vld [vmem:[%s5 + $0x38] sm:$0xff]
    %v287 = vld [vmem:[%s5 + $0x40] sm:$0xff]
    %v288 = vld [vmem:[%s5 + $0x48] sm:$0xff]
    %v289 = vld [vmem:[%s5 + $0x50] sm:$0xff]
    %v290 = vld [vmem:[%s5 + $0x58] sm:$0xff]
    %v291 = vld [vmem:[%s5 + $0x60] sm:$0xff]
    %v292 = vld [vmem:[%s5 + $0x68] sm:$0xff]
    %v293 = vld [vmem:[%s5 + $0x70] sm:$0xff]
    %v294 = vld [vmem:[%s5 + $0x78] sm:$0xff]
    %295 = vmatprep.subr.mxu0 0.0
    %296 = vmatpush1.msra.mxu0 %v279
    %297 = vmatprep.subr.mxu0 0.0
    %298 = vmatpush1.msra.mxu0 %v280
    %299 = vmatprep.subr.mxu0 0.0
    %300 = vmatpush1.msra.mxu0 %v281
    %301 = vmatprep.subr.mxu0 0.0
    %302 = vmatpush1.msra.mxu0 %v282
    %303 = vmatprep.subr.mxu0 0.0
    %304 = vmatpush1.msra.mxu0 %v283
    %305 = vmatprep.subr.mxu0 0.0
    %306 = vmatpush1.msra.mxu0 %v284
    %307 = vmatprep.subr.mxu0 0.0
    %308 = vmatpush1.msra.mxu0 %v285
    %309 = vmatprep.subr.mxu0 0.0
    %310 = vmatpush1.msra.mxu0 %v286
    %311 = vmatprep.subr.mxu0 0.0
    %312 = vmatpush1.msra.mxu0 %v287
    %313 = vmatprep.subr.mxu0 0.0
    %314 = vmatpush1.msra.mxu0 %v288
    %315 = vmatprep.subr.mxu0 0.0
    %316 = vmatpush1.msra.mxu0 %v289
    %317 = vmatprep.subr.mxu0 0.0
    %318 = vmatpush1.msra.mxu0 %v290
    %319 = vmatprep.subr.mxu0 0.0
    %320 = vmatpush1.msra.mxu0 %v291
    %321 = vmatprep.subr.mxu0 0.0
    %322 = vmatpush1.msra.mxu0 %v292
    %323 = vmatprep.subr.mxu0 0.0
    %324 = vmatpush1.msra.mxu0 %v293
    %325 = vmatprep.subr.mxu0 0.0
    %326 = vmatpush1.msra.mxu0 %v294
    %327 = vmatprep.subr.mxu0 0.0
    %328 = vmatpush1.msra.mxu0 0.0
    %329 = vmatprep.subr.mxu0 0.0
    %330 = vmatpush1.msra.mxu0 0.0
    %331 = vmatprep.subr.mxu0 0.0
    %332 = vmatpush1.msra.mxu0 0.0
    %333 = vmatprep.subr.mxu0 0.0
    %334 = vmatpush1.msra.mxu0 0.0
    %335 = vmatprep.subr.mxu0 0.0
    %336 = vmatpush1.msra.mxu0 0.0
    %337 = vmatprep.subr.mxu0 0.0
    %338 = vmatpush1.msra.mxu0 0.0
    %339 = vmatprep.subr.mxu0 0.0
    %340 = vmatpush1.msra.mxu0 0.0
    %341 = vmatprep.subr.mxu0 0.0
    %342 = vmatpush1.msra.mxu0 0.0
    %343 = vmatprep.subr.mxu0 0.0
    %344 = vmatpush1.msra.mxu0 0.0
    %345 = vmatprep.subr.mxu0 0.0
    %346 = vmatpush1.msra.mxu0 0.0
    %347 = vmatprep.subr.mxu0 0.0
    %348 = vmatpush1.msra.mxu0 0.0
    %349 = vmatprep.subr.mxu0 0.0
    %350 = vmatpush1.msra.mxu0 0.0
    %351 = vmatprep.subr.mxu0 0.0
    %352 = vmatpush1.msra.mxu0 0.0
    %353 = vmatprep.subr.mxu0 0.0
    %354 = vmatpush1.msra.mxu0 0.0
    %355 = vmatprep.subr.mxu0 0.0
    %356 = vmatpush1.msra.mxu0 0.0
    %357 = vmatprep.subr.mxu0 0.0
    %358 = vmatpush1.msra.mxu0 0.0
    %359 = vmatprep.mubr.f32.mxu0 0.0
    %360 = vmatmul.mubr.f32.gmra.mrb[0].mxu0 %v261
    %v361 = vpop.f32.mrb[0].mxu0
    %v362 = vadd.f32 0.0, %v361
    %v363 = vpop.f32.mrb[0].mxu0
    %364 = vmatprep.mubr.f32.mxu0 0.0
    %365 = vmatmul.mubr.f32.gmra.mrb[0].mxu0 %v262
    %v366 = vpop.f32.mrb[0].mxu0
    %v367 = vadd.f32 0.0, %v366
    %v368 = vpop.f32.mrb[0].mxu0
    %369 = vmatprep.mubr.f32.mxu0 0.0
    %370 = vmatmul.mubr.f32.gmra.mrb[0].mxu0 %v263
    %v371 = vpop.f32.mrb[0].mxu0
    %v372 = vadd.f32 0.0, %v371
    %v373 = vpop.f32.mrb[0].mxu0
    %374 = vmatprep.mubr.f32.mxu0 0.0
    %375 = vmatmul.mubr.f32.gmra.mrb[0].mxu0 %v264
    %v376 = vpop.f32.mrb[0].mxu0
    %v377 = vadd.f32 0.0, %v376
    %v378 = vpop.f32.mrb[0].mxu0
    %379 = vmatprep.mubr.f32.mxu0 0.0
    %380 = vmatmul.mubr.f32.gmra.mrb[0].mxu0 %v265
    %v381 = vpop.f32.mrb[0].mxu0
    %v382 = vadd.f32 0.0, %v381
    %v383 = vpop.f32.mrb[0].mxu0
    %384 = vmatprep.mubr.f32.mxu0 0.0
    %385 = vmatmul.mubr.f32.gmra.mrb[0].mxu0 %v266
    %v386 = vpop.f32.mrb[0].mxu0
    %v387 = vadd.f32 0.0, %v386
    %v388 = vpop.f32.mrb[0].mxu0
    %389 = vmatprep.mubr.f32.mxu0 0.0
    %390 = vmatmul.mubr.f32.gmra.mrb[0].mxu0 %v267
    %v391 = vpop.f32.mrb[0].mxu0
    %v392 = vadd.f32 0.0, %v391
    %v393 = vpop.f32.mrb[0].mxu0
    %394 = vmatprep.mubr.f32.mxu0 0.0
    %395 = vmatmul.mubr.f32.gmra.mrb[0].mxu0 %v268
    %v396 = vpop.f32.mrb[0].mxu0
    %v397 = vadd.f32 0.0, %v396
    %v398 = vpop.f32.mrb[0].mxu0
    %399 = vmatprep.mubr.f32.mxu0 0.0
    %400 = vmatmul.mubr.f32.gmra.mrb[0].mxu0 %v269
    %v401 = vpop.f32.mrb[0].mxu0
    %v402 = vadd.f32 0.0, %v401
    %v403 = vpop.f32.mrb[0].mxu0
    %404 = vmatprep.mubr.f32.mxu0 0.0
    %405 = vmatmul.mubr.f32.gmra.mrb[0].mxu0 %v270
    %v406 = vpop.f32.mrb[0].mxu0
    %v407 = vadd.f32 0.0, %v406
    %v408 = vpop.f32.mrb[0].mxu0
    %409 = vmatprep.mubr.f32.mxu0 0.0
    %410 = vmatmul.mubr.f32.gmra.mrb[0].mxu0 %v271
    %v411 = vpop.f32.mrb[0].mxu0
    %v412 = vadd.f32 0.0, %v411
    %v413 = vpop.f32.mrb[0].mxu0
    %414 = vmatprep.mubr.f32.mxu0 0.0
    %415 = vmatmul.mubr.f32.gmra.mrb[0].mxu0 %v272
    %v416 = vpop.f32.mrb[0].mxu0
    %v417 = vadd.f32 0.0, %v416
    %v418 = vpop.f32.mrb[0].mxu0
    %419 = vmatprep.mubr.f32.mxu0 0.0
    %420 = vmatmul.mubr.f32.gmra.mrb[0].mxu0 %v273
    %v421 = vpop.f32.mrb[0].mxu0
    %v422 = vadd.f32 0.0, %v421
    %v423 = vpop.f32.mrb[0].mxu0
    %424 = vmatprep.mubr.f32.mxu0 0.0
    %425 = vmatmul.mubr.f32.gmra.mrb[0].mxu0 %v274
    %v426 = vpop.f32.mrb[0].mxu0
    %v427 = vadd.f32 0.0, %v426
    %v428 = vpop.f32.mrb[0].mxu0
    %429 = vmatprep.mubr.f32.mxu0 0.0
    %430 = vmatmul.mubr.f32.gmra.mrb[0].mxu0 %v275
    %v431 = vpop.f32.mrb[0].mxu0
    %v432 = vadd.f32 0.0, %v431
    %v433 = vpop.f32.mrb[0].mxu0
    %434 = vmatprep.mubr.f32.mxu0 0.0
    %435 = vmatmul.mubr.f32.gmra.mrb[0].mxu0 %v276
    %v436 = vpop.f32.mrb[0].mxu0
    %v437 = vadd.f32 0.0, %v436
    %v438 = vpop.f32.mrb[0].mxu0
    %439 = vdwg.mxu0
    %441 = vset.pattern.permute.xlu0 0
    %442 = vperm.xlu0 %441, %v362
    %v443 = vpop.permute.xlu0 %442
    %446 = vset.pattern.permute.xlu0 0
    %447 = vperm.xlu0 %446, %v367
    %v448 = vpop.permute.xlu0 %447
    %451 = vset.pattern.permute.xlu0 0
    %452 = vperm.xlu0 %451, %v372
    %v453 = vpop.permute.xlu0 %452
    %456 = vset.pattern.permute.xlu0 0
    %457 = vperm.xlu0 %456, %v377
    %v458 = vpop.permute.xlu0 %457
    %461 = vset.pattern.permute.xlu0 0
    %462 = vperm.xlu0 %461, %v382
    %v463 = vpop.permute.xlu0 %462
    %466 = vset.pattern.permute.xlu0 0
    %467 = vperm.xlu0 %466, %v387
    %v468 = vpop.permute.xlu0 %467
    %471 = vset.pattern.permute.xlu0 0
    %472 = vperm.xlu0 %471, %v392
    %v473 = vpop.permute.xlu0 %472
    %476 = vset.pattern.permute.xlu0 0
    %477 = vperm.xlu0 %476, %v397
    %v478 = vpop.permute.xlu0 %477
    %481 = vset.pattern.permute.xlu0 0
    %482 = vperm.xlu0 %481, %v402
    %v483 = vpop.permute.xlu0 %482
    %486 = vset.pattern.permute.xlu0 0
    %487 = vperm.xlu0 %486, %v407
    %v488 = vpop.permute.xlu0 %487
    %491 = vset.pattern.permute.xlu0 0
    %492 = vperm.xlu0 %491, %v412
    %v493 = vpop.permute.xlu0 %492
    %496 = vset.pattern.permute.xlu0 0
    %497 = vperm.xlu0 %496, %v417
    %v498 = vpop.permute.xlu0 %497
    %501 = vset.pattern.permute.xlu0 0
    %502 = vperm.xlu0 %501, %v422
    %v503 = vpop.permute.xlu0 %502
    %506 = vset.pattern.permute.xlu0 0
    %507 = vperm.xlu0 %506, %v427
    %v508 = vpop.permute.xlu0 %507
    %511 = vset.pattern.permute.xlu0 0
    %512 = vperm.xlu0 %511, %v432
    %v513 = vpop.permute.xlu0 %512
    %516 = vset.pattern.permute.xlu0 0
    %517 = vperm.xlu0 %516, %v437
    %v518 = vpop.permute.xlu0 %517
    %v520 = vsub.f32 %v261, %v443
    %v521 = vsub.f32 %v262, %v448
    %v522 = vsub.f32 %v263, %v453
    %v523 = vsub.f32 %v264, %v458
    %v524 = vsub.f32 %v265, %v463
    %v525 = vsub.f32 %v266, %v468
    %v526 = vsub.f32 %v267, %v473
    %v527 = vsub.f32 %v268, %v478
    %v528 = vsub.f32 %v269, %v483
    %v529 = vsub.f32 %v270, %v488
    %v530 = vsub.f32 %v271, %v493
    %v531 = vsub.f32 %v272, %v498
    %v532 = vsub.f32 %v273, %v503
    %v533 = vsub.f32 %v274, %v508
    %v534 = vsub.f32 %v275, %v513
    %v535 = vsub.f32 %v276, %v518
    %v536 = vmul.f32 %v520, %v520
    %v537 = vmul.f32 %v521, %v521
    %v538 = vmul.f32 %v522, %v522
    %v539 = vmul.f32 %v523, %v523
    %v540 = vmul.f32 %v524, %v524
    %v541 = vmul.f32 %v525, %v525
    %v542 = vmul.f32 %v526, %v526
    %v543 = vmul.f32 %v527, %v527
    %v544 = vmul.f32 %v528, %v528
    %v545 = vmul.f32 %v529, %v529
    %v546 = vmul.f32 %v530, %v530
    %v547 = vmul.f32 %v531, %v531
    %v548 = vmul.f32 %v532, %v532
    %v549 = vmul.f32 %v533, %v533
    %v550 = vmul.f32 %v534, %v534
    %v551 = vmul.f32 %v535, %v535
    %552 = vmatprep.subr.mxu0 0.0
    %553 = vmatpush1.msra.mxu0 %v279
    %554 = vmatprep.subr.mxu0 0.0
    %555 = vmatpush1.msra.mxu0 %v280
    %556 = vmatprep.subr.mxu0 0.0
    %557 = vmatpush1.msra.mxu0 %v281
    %558 = vmatprep.subr.mxu0 0.0
    %559 = vmatpush1.msra.mxu0 %v282
    %560 = vmatprep.subr.mxu0 0.0
    %561 = vmatpush1.msra.mxu0 %v283
    %562 = vmatprep.subr.mxu0 0.0
    %563 = vmatpush1.msra.mxu0 %v284
    %564 = vmatprep.subr.mxu0 0.0
    %565 = vmatpush1.msra.mxu0 %v285
    %566 = vmatprep.subr.mxu0 0.0
    %567 = vmatpush1.msra.mxu0 %v286
    %568 = vmatprep.subr.mxu0 0.0
    %569 = vmatpush1.msra.mxu0 %v287
    %570 = vmatprep.subr.mxu0 0.0
    %571 = vmatpush1.msra.mxu0 %v288
    %572 = vmatprep.subr.mxu0 0.0
    %573 = vmatpush1.msra.mxu0 %v289
    %574 = vmatprep.subr.mxu0 0.0
    %575 = vmatpush1.msra.mxu0 %v290
    %576 = vmatprep.subr.mxu0 0.0
    %577 = vmatpush1.msra.mxu0 %v291
    %578 = vmatprep.subr.mxu0 0.0
    %579 = vmatpush1.msra.mxu0 %v292
    %580 = vmatprep.subr.mxu0 0.0
    %581 = vmatpush1.msra.mxu0 %v293
    %582 = vmatprep.subr.mxu0 0.0
    %583 = vmatpush1.msra.mxu0 %v294
    %584 = vmatprep.subr.mxu0 0.0
    %585 = vmatpush1.msra.mxu0 0.0
    %586 = vmatprep.subr.mxu0 0.0
    %587 = vmatpush1.msra.mxu0 0.0
    %588 = vmatprep.subr.mxu0 0.0
    %589 = vmatpush1.msra.mxu0 0.0
    %590 = vmatprep.subr.mxu0 0.0
    %591 = vmatpush1.msra.mxu0 0.0
    %592 = vmatprep.subr.mxu0 0.0
    %593 = vmatpush1.msra.mxu0 0.0
    %594 = vmatprep.subr.mxu0 0.0
    %595 = vmatpush1.msra.mxu0 0.0
    %596 = vmatprep.subr.mxu0 0.0
    %597 = vmatpush1.msra.mxu0 0.0
    %598 = vmatprep.subr.mxu0 0.0
    %599 = vmatpush1.msra.mxu0 0.0
    %600 = vmatprep.subr.mxu0 0.0
    %601 = vmatpush1.msra.mxu0 0.0
    %602 = vmatprep.subr.mxu0 0.0
    %603 = vmatpush1.msra.mxu0 0.0
    %604 = vmatprep.subr.mxu0 0.0
    %605 = vmatpush1.msra.mxu0 0.0
    %606 = vmatprep.subr.mxu0 0.0
    %607 = vmatpush1.msra.mxu0 0.0
    %608 = vmatprep.subr.mxu0 0.0
    %609 = vmatpush1.msra.mxu0 0.0
    %610 = vmatprep.subr.mxu0 0.0
    %611 = vmatpush1.msra.mxu0 0.0
    %612 = vmatprep.subr.mxu0 0.0
    %613 = vmatpush1.msra.mxu0 0.0
    %614 = vmatprep.subr.mxu0 0.0
    %615 = vmatpush1.msra.mxu0 0.0
    %616 = vmatprep.mubr.f32.mxu0 0.0
    %617 = vmatmul.mubr.f32.gmra.mrb[0].mxu0 %v536
    %v618 = vpop.f32.mrb[0].mxu0
    %v619 = vadd.f32 0.0, %v618
    %v620 = vpop.f32.mrb[0].mxu0
    %621 = vmatprep.mubr.f32.mxu0 0.0
    %622 = vmatmul.mubr.f32.gmra.mrb[0].mxu0 %v537
    %v623 = vpop.f32.mrb[0].mxu0
    %v624 = vadd.f32 0.0, %v623
    %v625 = vpop.f32.mrb[0].mxu0
    %626 = vmatprep.mubr.f32.mxu0 0.0
    %627 = vmatmul.mubr.f32.gmra.mrb[0].mxu0 %v538
    %v628 = vpop.f32.mrb[0].mxu0
    %v629 = vadd.f32 0.0, %v628
    %v630 = vpop.f32.mrb[0].mxu0
    %631 = vmatprep.mubr.f32.mxu0 0.0
    %632 = vmatmul.mubr.f32.gmra.mrb[0].mxu0 %v539
    %v633 = vpop.f32.mrb[0].mxu0
    %v634 = vadd.f32 0.0, %v633
    %v635 = vpop.f32.mrb[0].mxu0
    %636 = vmatprep.mubr.f32.mxu0 0.0
    %637 = vmatmul.mubr.f32.gmra.mrb[0].mxu0 %v540
    %v638 = vpop.f32.mrb[0].mxu0
    %v639 = vadd.f32 0.0, %v638
    %v640 = vpop.f32.mrb[0].mxu0
    %641 = vmatprep.mubr.f32.mxu0 0.0
    %642 = vmatmul.mubr.f32.gmra.mrb[0].mxu0 %v541
    %v643 = vpop.f32.mrb[0].mxu0
    %v644 = vadd.f32 0.0, %v643
    %v645 = vpop.f32.mrb[0].mxu0
    %646 = vmatprep.mubr.f32.mxu0 0.0
    %647 = vmatmul.mubr.f32.gmra.mrb[0].mxu0 %v542
    %v648 = vpop.f32.mrb[0].mxu0
    %v649 = vadd.f32 0.0, %v648
    %v650 = vpop.f32.mrb[0].mxu0
    %651 = vmatprep.mubr.f32.mxu0 0.0
    %652 = vmatmul.mubr.f32.gmra.mrb[0].mxu0 %v543
    %v653 = vpop.f32.mrb[0].mxu0
    %v654 = vadd.f32 0.0, %v653
    %v655 = vpop.f32.mrb[0].mxu0
    %656 = vmatprep.mubr.f32.mxu0 0.0
    %657 = vmatmul.mubr.f32.gmra.mrb[0].mxu0 %v544
    %v658 = vpop.f32.mrb[0].mxu0
    %v659 = vadd.f32 0.0, %v658
    %v660 = vpop.f32.mrb[0].mxu0
    %661 = vmatprep.mubr.f32.mxu0 0.0
    %662 = vmatmul.mubr.f32.gmra.mrb[0].mxu0 %v545
    %v663 = vpop.f32.mrb[0].mxu0
    %v664 = vadd.f32 0.0, %v663
    %v665 = vpop.f32.mrb[0].mxu0
    %666 = vmatprep.mubr.f32.mxu0 0.0
    %667 = vmatmul.mubr.f32.gmra.mrb[0].mxu0 %v546
    %v668 = vpop.f32.mrb[0].mxu0
    %v669 = vadd.f32 0.0, %v668
    %v670 = vpop.f32.mrb[0].mxu0
    %671 = vmatprep.mubr.f32.mxu0 0.0
    %672 = vmatmul.mubr.f32.gmra.mrb[0].mxu0 %v547
    %v673 = vpop.f32.mrb[0].mxu0
    %v674 = vadd.f32 0.0, %v673
    %v675 = vpop.f32.mrb[0].mxu0
    %676 = vmatprep.mubr.f32.mxu0 0.0
    %677 = vmatmul.mubr.f32.gmra.mrb[0].mxu0 %v548
    %v678 = vpop.f32.mrb[0].mxu0
    %v679 = vadd.f32 0.0, %v678
    %v680 = vpop.f32.mrb[0].mxu0
    %681 = vmatprep.mubr.f32.mxu0 0.0
    %682 = vmatmul.mubr.f32.gmra.mrb[0].mxu0 %v549
    %v683 = vpop.f32.mrb[0].mxu0
    %v684 = vadd.f32 0.0, %v683
    %v685 = vpop.f32.mrb[0].mxu0
    %686 = vmatprep.mubr.f32.mxu0 0.0
    %687 = vmatmul.mubr.f32.gmra.mrb[0].mxu0 %v550
    %v688 = vpop.f32.mrb[0].mxu0
    %v689 = vadd.f32 0.0, %v688
    %v690 = vpop.f32.mrb[0].mxu0
    %691 = vmatprep.mubr.f32.mxu0 0.0
    %692 = vmatmul.mubr.f32.gmra.mrb[0].mxu0 %v551
    %v693 = vpop.f32.mrb[0].mxu0
    %v694 = vadd.f32 0.0, %v693
    %v695 = vpop.f32.mrb[0].mxu0
    %696 = vdwg.mxu0
    %v697 = vadd.f32 %v619, 1e-05
    %v698 = vadd.f32 %v624, 1e-05
    %v699 = vadd.f32 %v629, 1e-05
    %v700 = vadd.f32 %v634, 1e-05
    %v701 = vadd.f32 %v639, 1e-05
    %v702 = vadd.f32 %v644, 1e-05
    %v703 = vadd.f32 %v649, 1e-05
    %v704 = vadd.f32 %v654, 1e-05
    %v705 = vadd.f32 %v659, 1e-05
    %v706 = vadd.f32 %v664, 1e-05
    %v707 = vadd.f32 %v669, 1e-05
    %v708 = vadd.f32 %v674, 1e-05
    %v709 = vadd.f32 %v679, 1e-05
    %v710 = vadd.f32 %v684, 1e-05
    %v711 = vadd.f32 %v689, 1e-05
    %v712 = vadd.f32 %v694, 1e-05
    %v713 = vrsqrt.pop %v697
    %v714 = vrsqrt.pop %v698
    %v715 = vrsqrt.pop %v699
    %v716 = vrsqrt.pop %v700
    %v717 = vrsqrt.pop %v701
    %v718 = vrsqrt.pop %v702
    %v719 = vrsqrt.pop %v703
    %v720 = vrsqrt.pop %v704
    %v721 = vrsqrt.pop %v705
    %v722 = vrsqrt.pop %v706
    %v723 = vrsqrt.pop %v707
    %v724 = vrsqrt.pop %v708
    %v725 = vrsqrt.pop %v709
    %v726 = vrsqrt.pop %v710
    %v727 = vrsqrt.pop %v711
    %v728 = vrsqrt.pop %v712
    %730 = vset.pattern.permute.xlu0 0
    %731 = vperm.xlu0 %730, %v713
    %v732 = vpop.permute.xlu0 %731
    %735 = vset.pattern.permute.xlu0 0
    %736 = vperm.xlu0 %735, %v714
    %v737 = vpop.permute.xlu0 %736
    %740 = vset.pattern.permute.xlu0 0
    %741 = vperm.xlu0 %740, %v715
    %v742 = vpop.permute.xlu0 %741
    %745 = vset.pattern.permute.xlu0 0
    %746 = vperm.xlu0 %745, %v716
    %v747 = vpop.permute.xlu0 %746
    %750 = vset.pattern.permute.xlu0 0
    %751 = vperm.xlu0 %750, %v717
    %v752 = vpop.permute.xlu0 %751
    %755 = vset.pattern.permute.xlu0 0
    %756 = vperm.xlu0 %755, %v718
    %v757 = vpop.permute.xlu0 %756
    %760 = vset.pattern.permute.xlu0 0
    %761 = vperm.xlu0 %760, %v719
    %v762 = vpop.permute.xlu0 %761
    %765 = vset.pattern.permute.xlu0 0
    %766 = vperm.xlu0 %765, %v720
    %v767 = vpop.permute.xlu0 %766
    %770 = vset.pattern.permute.xlu0 0
    %771 = vperm.xlu0 %770, %v721
    %v772 = vpop.permute.xlu0 %771
    %775 = vset.pattern.permute.xlu0 0
    %776 = vperm.xlu0 %775, %v722
    %v777 = vpop.permute.xlu0 %776
    %780 = vset.pattern.permute.xlu0 0
    %781 = vperm.xlu0 %780, %v723
    %v782 = vpop.permute.xlu0 %781
    %785 = vset.pattern.permute.xlu0 0
    %786 = vperm.xlu0 %785, %v724
    %v787 = vpop.permute.xlu0 %786
    %790 = vset.pattern.permute.xlu0 0
    %791 = vperm.xlu0 %790, %v725
    %v792 = vpop.permute.xlu0 %791
    %795 = vset.pattern.permute.xlu0 0
    %796 = vperm.xlu0 %795, %v726
    %v797 = vpop.permute.xlu0 %796
    %800 = vset.pattern.permute.xlu0 0
    %801 = vperm.xlu0 %800, %v727
    %v802 = vpop.permute.xlu0 %801
    %805 = vset.pattern.permute.xlu0 0
    %806 = vperm.xlu0 %805, %v728
    %v807 = vpop.permute.xlu0 %806
    %v809 = vmul.f32 %v520, %v732
    %v810 = vmul.f32 %v521, %v737
    %v811 = vmul.f32 %v522, %v742
    %v812 = vmul.f32 %v523, %v747
    %v813 = vmul.f32 %v524, %v752
    %v814 = vmul.f32 %v525, %v757
    %v815 = vmul.f32 %v526, %v762
    %v816 = vmul.f32 %v527, %v767
    %v817 = vmul.f32 %v528, %v772
    %v818 = vmul.f32 %v529, %v777
    %v819 = vmul.f32 %v530, %v782
    %v820 = vmul.f32 %v531, %v787
    %v821 = vmul.f32 %v532, %v792
    %v822 = vmul.f32 %v533, %v797
    %v823 = vmul.f32 %v534, %v802
    %v824 = vmul.f32 %v535, %v807
    %v826 = vlaneseq
    %v827 = vshrl.u32 %v826, 7
    %v828 = vsub.s32 0, %v827
    %v829 = vrot.slane %v277, %v828
    %v831 = vmul.f32 %v809, %v829
    %v832 = vmul.f32 %v810, %v829
    %v833 = vmul.f32 %v811, %v829
    %v834 = vmul.f32 %v812, %v829
    %v835 = vmul.f32 %v813, %v829
    %v836 = vmul.f32 %v814, %v829
    %v837 = vmul.f32 %v815, %v829
    %v838 = vmul.f32 %v816, %v829
    %v839 = vmul.f32 %v817, %v829
    %v840 = vmul.f32 %v818, %v829
    %v841 = vmul.f32 %v819, %v829
    %v842 = vmul.f32 %v820, %v829
    %v843 = vmul.f32 %v821, %v829
    %v844 = vmul.f32 %v822, %v829
    %v845 = vmul.f32 %v823, %v829
    %v846 = vmul.f32 %v824, %v829
    %v848 = vlaneseq
    %v849 = vshrl.u32 %v848, 7
    %v850 = vsub.s32 0, %v849
    %v851 = vrot.slane %v278, %v850
    %v853 = vadd.f32 %v831, %v851
    %v854 = vadd.f32 %v832, %v851
    %v855 = vadd.f32 %v833, %v851
    %v856 = vadd.f32 %v834, %v851
    %v857 = vadd.f32 %v835, %v851
    %v858 = vadd.f32 %v836, %v851
    %v859 = vadd.f32 %v837, %v851
    %v860 = vadd.f32 %v838, %v851
    %v861 = vadd.f32 %v839, %v851
    %v862 = vadd.f32 %v840, %v851
    %v863 = vadd.f32 %v841, %v851
    %v864 = vadd.f32 %v842, %v851
    %v865 = vadd.f32 %v843, %v851
    %v866 = vadd.f32 %v844, %v851
    %v867 = vadd.f32 %v845, %v851
    %v868 = vadd.f32 %v846, %v851
    %v869 = vld [vmem:[%s6] sm:$0xff]
    %v870 = vld [vmem:[%s6 + $0x8] sm:$0xff]
    %v871 = vld [vmem:[%s6 + $0x10] sm:$0xff]
    %v872 = vld [vmem:[%s6 + $0x18] sm:$0xff]
    %v873 = vld [vmem:[%s6 + $0x20] sm:$0xff]
    %v874 = vld [vmem:[%s6 + $0x28] sm:$0xff]
    %v875 = vld [vmem:[%s6 + $0x30] sm:$0xff]
    %v876 = vld [vmem:[%s6 + $0x38] sm:$0xff]
    %v877 = vld [vmem:[%s6 + $0x40] sm:$0xff]
    %v878 = vld [vmem:[%s6 + $0x48] sm:$0xff]
    %v879 = vld [vmem:[%s6 + $0x50] sm:$0xff]
    %v880 = vld [vmem:[%s6 + $0x58] sm:$0xff]
    %v881 = vld [vmem:[%s6 + $0x60] sm:$0xff]
    %v882 = vld [vmem:[%s6 + $0x68] sm:$0xff]
    %v883 = vld [vmem:[%s6 + $0x70] sm:$0xff]
    %v884 = vld [vmem:[%s6 + $0x78] sm:$0xff]
    %v885 = vld [vmem:[%s7] sm:$0x1]
    %v887 = vlaneseq
    %v888 = vshrl.u32 %v887, 7
    %v889 = vsub.s32 0, %v888
    %v890 = vrot.slane %v885, %v889
    %892 = vmatprep.subr.mxu0 0.0
    %893 = vmatpush1.msra.mxu0 %v869
    %894 = vmatprep.subr.mxu0 0.0
    %895 = vmatpush1.msra.mxu0 %v870
    %896 = vmatprep.subr.mxu0 0.0
    %897 = vmatpush1.msra.mxu0 %v871
    %898 = vmatprep.subr.mxu0 0.0
    %899 = vmatpush1.msra.mxu0 %v872
    %900 = vmatprep.subr.mxu0 0.0
    %901 = vmatpush1.msra.mxu0 %v873
    %902 = vmatprep.subr.mxu0 0.0
    %903 = vmatpush1.msra.mxu0 %v874
    %904 = vmatprep.subr.mxu0 0.0
    %905 = vmatpush1.msra.mxu0 %v875
    %906 = vmatprep.subr.mxu0 0.0
    %907 = vmatpush1.msra.mxu0 %v876
    %908 = vmatprep.subr.mxu0 0.0
    %909 = vmatpush1.msra.mxu0 %v877
    %910 = vmatprep.subr.mxu0 0.0
    %911 = vmatpush1.msra.mxu0 %v878
    %912 = vmatprep.subr.mxu0 0.0
    %913 = vmatpush1.msra.mxu0 %v879
    %914 = vmatprep.subr.mxu0 0.0
    %915 = vmatpush1.msra.mxu0 %v880
    %916 = vmatprep.subr.mxu0 0.0
    %917 = vmatpush1.msra.mxu0 %v881
    %918 = vmatprep.subr.mxu0 0.0
    %919 = vmatpush1.msra.mxu0 %v882
    %920 = vmatprep.subr.mxu0 0.0
    %921 = vmatpush1.msra.mxu0 %v883
    %922 = vmatprep.subr.mxu0 0.0
    %923 = vmatpush1.msra.mxu0 %v884
    %924 = vmatprep.subr.mxu0 0.0
    %925 = vmatpush1.msra.mxu0 0.0
    %926 = vmatprep.subr.mxu0 0.0
    %927 = vmatpush1.msra.mxu0 0.0
    %928 = vmatprep.subr.mxu0 0.0
    %929 = vmatpush1.msra.mxu0 0.0
    %930 = vmatprep.subr.mxu0 0.0
    %931 = vmatpush1.msra.mxu0 0.0
    %932 = vmatprep.subr.mxu0 0.0
    %933 = vmatpush1.msra.mxu0 0.0
    %934 = vmatprep.subr.mxu0 0.0
    %935 = vmatpush1.msra.mxu0 0.0
    %936 = vmatprep.subr.mxu0 0.0
    %937 = vmatpush1.msra.mxu0 0.0
    %938 = vmatprep.subr.mxu0 0.0
    %939 = vmatpush1.msra.mxu0 0.0
    %940 = vmatprep.subr.mxu0 0.0
    %941 = vmatpush1.msra.mxu0 0.0
    %942 = vmatprep.subr.mxu0 0.0
    %943 = vmatpush1.msra.mxu0 0.0
    %944 = vmatprep.subr.mxu0 0.0
    %945 = vmatpush1.msra.mxu0 0.0
    %946 = vmatprep.subr.mxu0 0.0
    %947 = vmatpush1.msra.mxu0 0.0
    %948 = vmatprep.subr.mxu0 0.0
    %949 = vmatpush1.msra.mxu0 0.0
    %950 = vmatprep.subr.mxu0 0.0
    %951 = vmatpush1.msra.mxu0 0.0
    %952 = vmatprep.subr.mxu0 0.0
    %953 = vmatpush1.msra.mxu0 0.0
    %954 = vmatprep.subr.mxu0 0.0
    %955 = vmatpush1.msra.mxu0 0.0
    %956 = vmatprep.mubr.f32.mxu0 0.0
    %957 = vmatmul.mubr.f32.gmra.mrb[0].mxu0 %v853
    %v958 = vpop.f32.mrb[0].mxu0
    %v959 = vadd.f32 %v890, %v958
    %v960 = vpop.f32.mrb[0].mxu0
    %961 = vmatprep.mubr.f32.mxu0 0.0
    %962 = vmatmul.mubr.f32.gmra.mrb[0].mxu0 %v854
    %v963 = vpop.f32.mrb[0].mxu0
    %v964 = vadd.f32 %v890, %v963
    %v965 = vpop.f32.mrb[0].mxu0
    %966 = vmatprep.mubr.f32.mxu0 0.0
    %967 = vmatmul.mubr.f32.gmra.mrb[0].mxu0 %v855
    %v968 = vpop.f32.mrb[0].mxu0
    %v969 = vadd.f32 %v890, %v968
    %v970 = vpop.f32.mrb[0].mxu0
    %971 = vmatprep.mubr.f32.mxu0 0.0
    %972 = vmatmul.mubr.f32.gmra.mrb[0].mxu0 %v856
    %v973 = vpop.f32.mrb[0].mxu0
    %v974 = vadd.f32 %v890, %v973
    %v975 = vpop.f32.mrb[0].mxu0
    %976 = vmatprep.mubr.f32.mxu0 0.0
    %977 = vmatmul.mubr.f32.gmra.mrb[0].mxu0 %v857
    %v978 = vpop.f32.mrb[0].mxu0
    %v979 = vadd.f32 %v890, %v978
    %v980 = vpop.f32.mrb[0].mxu0
    %981 = vmatprep.mubr.f32.mxu0 0.0
    %982 = vmatmul.mubr.f32.gmra.mrb[0].mxu0 %v858
    %v983 = vpop.f32.mrb[0].mxu0
    %v984 = vadd.f32 %v890, %v983
    %v985 = vpop.f32.mrb[0].mxu0
    %986 = vmatprep.mubr.f32.mxu0 0.0
    %987 = vmatmul.mubr.f32.gmra.mrb[0].mxu0 %v859
    %v988 = vpop.f32.mrb[0].mxu0
    %v989 = vadd.f32 %v890, %v988
    %v990 = vpop.f32.mrb[0].mxu0
    %991 = vmatprep.mubr.f32.mxu0 0.0
    %992 = vmatmul.mubr.f32.gmra.mrb[0].mxu0 %v860
    %v993 = vpop.f32.mrb[0].mxu0
    %v994 = vadd.f32 %v890, %v993
    %v995 = vpop.f32.mrb[0].mxu0
    %996 = vmatprep.mubr.f32.mxu0 0.0
    %997 = vmatmul.mubr.f32.gmra.mrb[0].mxu0 %v861
    %v998 = vpop.f32.mrb[0].mxu0
    %v999 = vadd.f32 %v890, %v998
    %v1000 = vpop.f32.mrb[0].mxu0
    %1001 = vmatprep.mubr.f32.mxu0 0.0
    %1002 = vmatmul.mubr.f32.gmra.mrb[0].mxu0 %v862
    %v1003 = vpop.f32.mrb[0].mxu0
    %v1004 = vadd.f32 %v890, %v1003
    %v1005 = vpop.f32.mrb[0].mxu0
    %1006 = vmatprep.mubr.f32.mxu0 0.0
    %1007 = vmatmul.mubr.f32.gmra.mrb[0].mxu0 %v863
    %v1008 = vpop.f32.mrb[0].mxu0
    %v1009 = vadd.f32 %v890, %v1008
    %v1010 = vpop.f32.mrb[0].mxu0
    %1011 = vmatprep.mubr.f32.mxu0 0.0
    %1012 = vmatmul.mubr.f32.gmra.mrb[0].mxu0 %v864
    %v1013 = vpop.f32.mrb[0].mxu0
    %v1014 = vadd.f32 %v890, %v1013
    %v1015 = vpop.f32.mrb[0].mxu0
    %1016 = vmatprep.mubr.f32.mxu0 0.0
    %1017 = vmatmul.mubr.f32.gmra.mrb[0].mxu0 %v865
    %v1018 = vpop.f32.mrb[0].mxu0
    %v1019 = vadd.f32 %v890, %v1018
    %v1020 = vpop.f32.mrb[0].mxu0
    %1021 = vmatprep.mubr.f32.mxu0 0.0
    %1022 = vmatmul.mubr.f32.gmra.mrb[0].mxu0 %v866
    %v1023 = vpop.f32.mrb[0].mxu0
    %v1024 = vadd.f32 %v890, %v1023
    %v1025 = vpop.f32.mrb[0].mxu0
    %1026 = vmatprep.mubr.f32.mxu0 0.0
    %1027 = vmatmul.mubr.f32.gmra.mrb[0].mxu0 %v867
    %v1028 = vpop.f32.mrb[0].mxu0
    %v1029 = vadd.f32 %v890, %v1028
    %v1030 = vpop.f32.mrb[0].mxu0
    %1031 = vmatprep.mubr.f32.mxu0 0.0
    %1032 = vmatmul.mubr.f32.gmra.mrb[0].mxu0 %v868
    %v1033 = vpop.f32.mrb[0].mxu0
    %v1034 = vadd.f32 %v890, %v1033
    %v1035 = vpop.f32.mrb[0].mxu0
    %1036 = vdwg.mxu0
    %v1037 = vmax.f32 %v959, 0.0
    %v1038 = vmax.f32 %v964, 0.0
    %v1039 = vmax.f32 %v969, 0.0
    %v1040 = vmax.f32 %v974, 0.0
    %v1041 = vmax.f32 %v979, 0.0
    %v1042 = vmax.f32 %v984, 0.0
    %v1043 = vmax.f32 %v989, 0.0
    %v1044 = vmax.f32 %v994, 0.0
    %v1045 = vmax.f32 %v999, 0.0
    %v1046 = vmax.f32 %v1004, 0.0
    %v1047 = vmax.f32 %v1009, 0.0
    %v1048 = vmax.f32 %v1014, 0.0
    %v1049 = vmax.f32 %v1019, 0.0
    %v1050 = vmax.f32 %v1024, 0.0
    %v1051 = vmax.f32 %v1029, 0.0
    %v1052 = vmax.f32 %v1034, 0.0
    %v1053 = vld [vmem:[%s8] sm:$0x1]
    %v1054 = vld [vmem:[%s9] sm:$0x1]
    %v1055 = vld [vmem:[%s10] sm:$0xff]
    %v1056 = vld [vmem:[%s10 + $0x8] sm:$0xff]
    %v1057 = vld [vmem:[%s10 + $0x10] sm:$0xff]
    %v1058 = vld [vmem:[%s10 + $0x18] sm:$0xff]
    %v1059 = vld [vmem:[%s10 + $0x20] sm:$0xff]
    %v1060 = vld [vmem:[%s10 + $0x28] sm:$0xff]
    %v1061 = vld [vmem:[%s10 + $0x30] sm:$0xff]
    %v1062 = vld [vmem:[%s10 + $0x38] sm:$0xff]
    %vm1063 = vcmask 523264
    %v1065 = vsel %vm1063, %v1037, 0
    %v1068 = vsel %vm1063, %v1038, 0
    %v1071 = vsel %vm1063, %v1039, 0
    %v1074 = vsel %vm1063, %v1040, 0
    %v1077 = vsel %vm1063, %v1041, 0
    %v1080 = vsel %vm1063, %v1042, 0
    %v1083 = vsel %vm1063, %v1043, 0
    %v1086 = vsel %vm1063, %v1044, 0
    %v1089 = vsel %vm1063, %v1045, 0
    %v1092 = vsel %vm1063, %v1046, 0
    %v1095 = vsel %vm1063, %v1047, 0
    %v1098 = vsel %vm1063, %v1048, 0
    %v1101 = vsel %vm1063, %v1049, 0
    %v1104 = vsel %vm1063, %v1050, 0
    %v1107 = vsel %vm1063, %v1051, 0
    %v1110 = vsel %vm1063, %v1052, 0
    %1112 = vmatprep.subr.mxu0 0.0
    %1113 = vmatpush1.msra.mxu0 %v1055
    %1114 = vmatprep.subr.mxu0 0.0
    %1115 = vmatpush1.msra.mxu0 %v1056
    %1116 = vmatprep.subr.mxu0 0.0
    %1117 = vmatpush1.msra.mxu0 %v1057
    %1118 = vmatprep.subr.mxu0 0.0
    %1119 = vmatpush1.msra.mxu0 %v1058
    %1120 = vmatprep.subr.mxu0 0.0
    %1121 = vmatpush1.msra.mxu0 %v1059
    %1122 = vmatprep.subr.mxu0 0.0
    %1123 = vmatpush1.msra.mxu0 %v1060
    %1124 = vmatprep.subr.mxu0 0.0
    %1125 = vmatpush1.msra.mxu0 %v1061
    %1126 = vmatprep.subr.mxu0 0.0
    %1127 = vmatpush1.msra.mxu0 %v1062
    %1128 = vmatprep.subr.mxu0 0.0
    %1129 = vmatpush1.msra.mxu0 0.0
    %1130 = vmatprep.subr.mxu0 0.0
    %1131 = vmatpush1.msra.mxu0 0.0
    %1132 = vmatprep.subr.mxu0 0.0
    %1133 = vmatpush1.msra.mxu0 0.0
    %1134 = vmatprep.subr.mxu0 0.0
    %1135 = vmatpush1.msra.mxu0 0.0
    %1136 = vmatprep.subr.mxu0 0.0
    %1137 = vmatpush1.msra.mxu0 0.0
    %1138 = vmatprep.subr.mxu0 0.0
    %1139 = vmatpush1.msra.mxu0 0.0
    %1140 = vmatprep.subr.mxu0 0.0
    %1141 = vmatpush1.msra.mxu0 0.0
    %1142 = vmatprep.subr.mxu0 0.0
    %1143 = vmatpush1.msra.mxu0 0.0
    %1144 = vmatprep.subr.mxu0 0.0
    %1145 = vmatpush1.msra.mxu0 0.0
    %1146 = vmatprep.subr.mxu0 0.0
    %1147 = vmatpush1.msra.mxu0 0.0
    %1148 = vmatprep.subr.mxu0 0.0
    %1149 = vmatpush1.msra.mxu0 0.0
    %1150 = vmatprep.subr.mxu0 0.0
    %1151 = vmatpush1.msra.mxu0 0.0
    %1152 = vmatprep.subr.mxu0 0.0
    %1153 = vmatpush1.msra.mxu0 0.0
    %1154 = vmatprep.subr.mxu0 0.0
    %1155 = vmatpush1.msra.mxu0 0.0
    %1156 = vmatprep.subr.mxu0 0.0
    %1157 = vmatpush1.msra.mxu0 0.0
    %1158 = vmatprep.subr.mxu0 0.0
    %1159 = vmatpush1.msra.mxu0 0.0
    %1160 = vmatprep.subr.mxu0 0.0
    %1161 = vmatpush1.msra.mxu0 0.0
    %1162 = vmatprep.subr.mxu0 0.0
    %1163 = vmatpush1.msra.mxu0 0.0
    %1164 = vmatprep.subr.mxu0 0.0
    %1165 = vmatpush1.msra.mxu0 0.0
    %1166 = vmatprep.subr.mxu0 0.0
    %1167 = vmatpush1.msra.mxu0 0.0
    %1168 = vmatprep.subr.mxu0 0.0
    %1169 = vmatpush1.msra.mxu0 0.0
    %1170 = vmatprep.subr.mxu0 0.0
    %1171 = vmatpush1.msra.mxu0 0.0
    %1172 = vmatprep.subr.mxu0 0.0
    %1173 = vmatpush1.msra.mxu0 0.0
    %1174 = vmatprep.subr.mxu0 0.0
    %1175 = vmatpush1.msra.mxu0 0.0
    %1176 = vmatprep.mubr.f32.mxu0 0.0
    %1177 = vmatmul.mubr.f32.gmra.mrb[0].mxu0 %v1065
    %v1178 = vpop.f32.mrb[0].mxu0
    %v1179 = vadd.f32 0.0, %v1178
    %v1180 = vpop.f32.mrb[0].mxu0
    %1181 = vmatprep.mubr.f32.mxu0 0.0
    %1182 = vmatmul.mubr.f32.gmra.mrb[0].mxu0 %v1068
    %v1183 = vpop.f32.mrb[0].mxu0
    %v1184 = vadd.f32 0.0, %v1183
    %v1185 = vpop.f32.mrb[0].mxu0
    %1186 = vmatprep.mubr.f32.mxu0 0.0
    %1187 = vmatmul.mubr.f32.gmra.mrb[0].mxu0 %v1071
    %v1188 = vpop.f32.mrb[0].mxu0
    %v1189 = vadd.f32 0.0, %v1188
    %v1190 = vpop.f32.mrb[0].mxu0
    %1191 = vmatprep.mubr.f32.mxu0 0.0
    %1192 = vmatmul.mubr.f32.gmra.mrb[0].mxu0 %v1074
    %v1193 = vpop.f32.mrb[0].mxu0
    %v1194 = vadd.f32 0.0, %v1193
    %v1195 = vpop.f32.mrb[0].mxu0
    %1196 = vmatprep.mubr.f32.mxu0 0.0
    %1197 = vmatmul.mubr.f32.gmra.mrb[0].mxu0 %v1077
    %v1198 = vpop.f32.mrb[0].mxu0
    %v1199 = vadd.f32 0.0, %v1198
    %v1200 = vpop.f32.mrb[0].mxu0
    %1201 = vmatprep.mubr.f32.mxu0 0.0
    %1202 = vmatmul.mubr.f32.gmra.mrb[0].mxu0 %v1080
    %v1203 = vpop.f32.mrb[0].mxu0
    %v1204 = vadd.f32 0.0, %v1203
    %v1205 = vpop.f32.mrb[0].mxu0
    %1206 = vmatprep.mubr.f32.mxu0 0.0
    %1207 = vmatmul.mubr.f32.gmra.mrb[0].mxu0 %v1083
    %v1208 = vpop.f32.mrb[0].mxu0
    %v1209 = vadd.f32 0.0, %v1208
    %v1210 = vpop.f32.mrb[0].mxu0
    %1211 = vmatprep.mubr.f32.mxu0 0.0
    %1212 = vmatmul.mubr.f32.gmra.mrb[0].mxu0 %v1086
    %v1213 = vpop.f32.mrb[0].mxu0
    %v1214 = vadd.f32 0.0, %v1213
    %v1215 = vpop.f32.mrb[0].mxu0
    %1216 = vmatprep.mubr.f32.mxu0 0.0
    %1217 = vmatmul.mubr.f32.gmra.mrb[0].mxu0 %v1089
    %v1218 = vpop.f32.mrb[0].mxu0
    %v1219 = vadd.f32 0.0, %v1218
    %v1220 = vpop.f32.mrb[0].mxu0
    %1221 = vmatprep.mubr.f32.mxu0 0.0
    %1222 = vmatmul.mubr.f32.gmra.mrb[0].mxu0 %v1092
    %v1223 = vpop.f32.mrb[0].mxu0
    %v1224 = vadd.f32 0.0, %v1223
    %v1225 = vpop.f32.mrb[0].mxu0
    %1226 = vmatprep.mubr.f32.mxu0 0.0
    %1227 = vmatmul.mubr.f32.gmra.mrb[0].mxu0 %v1095
    %v1228 = vpop.f32.mrb[0].mxu0
    %v1229 = vadd.f32 0.0, %v1228
    %v1230 = vpop.f32.mrb[0].mxu0
    %1231 = vmatprep.mubr.f32.mxu0 0.0
    %1232 = vmatmul.mubr.f32.gmra.mrb[0].mxu0 %v1098
    %v1233 = vpop.f32.mrb[0].mxu0
    %v1234 = vadd.f32 0.0, %v1233
    %v1235 = vpop.f32.mrb[0].mxu0
    %1236 = vmatprep.mubr.f32.mxu0 0.0
    %1237 = vmatmul.mubr.f32.gmra.mrb[0].mxu0 %v1101
    %v1238 = vpop.f32.mrb[0].mxu0
    %v1239 = vadd.f32 0.0, %v1238
    %v1240 = vpop.f32.mrb[0].mxu0
    %1241 = vmatprep.mubr.f32.mxu0 0.0
    %1242 = vmatmul.mubr.f32.gmra.mrb[0].mxu0 %v1104
    %v1243 = vpop.f32.mrb[0].mxu0
    %v1244 = vadd.f32 0.0, %v1243
    %v1245 = vpop.f32.mrb[0].mxu0
    %1246 = vmatprep.mubr.f32.mxu0 0.0
    %1247 = vmatmul.mubr.f32.gmra.mrb[0].mxu0 %v1107
    %v1248 = vpop.f32.mrb[0].mxu0
    %v1249 = vadd.f32 0.0, %v1248
    %v1250 = vpop.f32.mrb[0].mxu0
    %1251 = vmatprep.mubr.f32.mxu0 0.0
    %1252 = vmatmul.mubr.f32.gmra.mrb[0].mxu0 %v1110
    %v1253 = vpop.f32.mrb[0].mxu0
    %v1254 = vadd.f32 0.0, %v1253
    %v1255 = vpop.f32.mrb[0].mxu0
    %1256 = vdwg.mxu0
    %1258 = vset.pattern.permute.xlu0 0
    %1259 = vperm.xlu0 %1258, %v1179
    %v1260 = vpop.permute.xlu0 %1259
    %1263 = vset.pattern.permute.xlu0 0
    %1264 = vperm.xlu0 %1263, %v1184
    %v1265 = vpop.permute.xlu0 %1264
    %1268 = vset.pattern.permute.xlu0 0
    %1269 = vperm.xlu0 %1268, %v1189
    %v1270 = vpop.permute.xlu0 %1269
    %1273 = vset.pattern.permute.xlu0 0
    %1274 = vperm.xlu0 %1273, %v1194
    %v1275 = vpop.permute.xlu0 %1274
    %1278 = vset.pattern.permute.xlu0 0
    %1279 = vperm.xlu0 %1278, %v1199
    %v1280 = vpop.permute.xlu0 %1279
    %1283 = vset.pattern.permute.xlu0 0
    %1284 = vperm.xlu0 %1283, %v1204
    %v1285 = vpop.permute.xlu0 %1284
    %1288 = vset.pattern.permute.xlu0 0
    %1289 = vperm.xlu0 %1288, %v1209
    %v1290 = vpop.permute.xlu0 %1289
    %1293 = vset.pattern.permute.xlu0 0
    %1294 = vperm.xlu0 %1293, %v1214
    %v1295 = vpop.permute.xlu0 %1294
    %1298 = vset.pattern.permute.xlu0 0
    %1299 = vperm.xlu0 %1298, %v1219
    %v1300 = vpop.permute.xlu0 %1299
    %1303 = vset.pattern.permute.xlu0 0
    %1304 = vperm.xlu0 %1303, %v1224
    %v1305 = vpop.permute.xlu0 %1304
    %1308 = vset.pattern.permute.xlu0 0
    %1309 = vperm.xlu0 %1308, %v1229
    %v1310 = vpop.permute.xlu0 %1309
    %1313 = vset.pattern.permute.xlu0 0
    %1314 = vperm.xlu0 %1313, %v1234
    %v1315 = vpop.permute.xlu0 %1314
    %1318 = vset.pattern.permute.xlu0 0
    %1319 = vperm.xlu0 %1318, %v1239
    %v1320 = vpop.permute.xlu0 %1319
    %1323 = vset.pattern.permute.xlu0 0
    %1324 = vperm.xlu0 %1323, %v1244
    %v1325 = vpop.permute.xlu0 %1324
    %1328 = vset.pattern.permute.xlu0 0
    %1329 = vperm.xlu0 %1328, %v1249
    %v1330 = vpop.permute.xlu0 %1329
    %1333 = vset.pattern.permute.xlu0 0
    %1334 = vperm.xlu0 %1333, %v1254
    %v1335 = vpop.permute.xlu0 %1334
    %v1337 = vsub.f32 %v1037, %v1260
    %v1338 = vsub.f32 %v1038, %v1265
    %v1339 = vsub.f32 %v1039, %v1270
    %v1340 = vsub.f32 %v1040, %v1275
    %v1341 = vsub.f32 %v1041, %v1280
    %v1342 = vsub.f32 %v1042, %v1285
    %v1343 = vsub.f32 %v1043, %v1290
    %v1344 = vsub.f32 %v1044, %v1295
    %v1345 = vsub.f32 %v1045, %v1300
    %v1346 = vsub.f32 %v1046, %v1305
    %v1347 = vsub.f32 %v1047, %v1310
    %v1348 = vsub.f32 %v1048, %v1315
    %v1349 = vsub.f32 %v1049, %v1320
    %v1350 = vsub.f32 %v1050, %v1325
    %v1351 = vsub.f32 %v1051, %v1330
    %v1352 = vsub.f32 %v1052, %v1335
    %v1353 = vmul.f32 %v1337, %v1337
    %v1354 = vmul.f32 %v1338, %v1338
    %v1355 = vmul.f32 %v1339, %v1339
    %v1356 = vmul.f32 %v1340, %v1340
    %v1357 = vmul.f32 %v1341, %v1341
    %v1358 = vmul.f32 %v1342, %v1342
    %v1359 = vmul.f32 %v1343, %v1343
    %v1360 = vmul.f32 %v1344, %v1344
    %v1361 = vmul.f32 %v1345, %v1345
    %v1362 = vmul.f32 %v1346, %v1346
    %v1363 = vmul.f32 %v1347, %v1347
    %v1364 = vmul.f32 %v1348, %v1348
    %v1365 = vmul.f32 %v1349, %v1349
    %v1366 = vmul.f32 %v1350, %v1350
    %v1367 = vmul.f32 %v1351, %v1351
    %v1368 = vmul.f32 %v1352, %v1352
    %v1370 = vsel %vm1063, %v1353, 0
    %v1373 = vsel %vm1063, %v1354, 0
    %v1376 = vsel %vm1063, %v1355, 0
    %v1379 = vsel %vm1063, %v1356, 0
    %v1382 = vsel %vm1063, %v1357, 0
    %v1385 = vsel %vm1063, %v1358, 0
    %v1388 = vsel %vm1063, %v1359, 0
    %v1391 = vsel %vm1063, %v1360, 0
    %v1394 = vsel %vm1063, %v1361, 0
    %v1397 = vsel %vm1063, %v1362, 0
    %v1400 = vsel %vm1063, %v1363, 0
    %v1403 = vsel %vm1063, %v1364, 0
    %v1406 = vsel %vm1063, %v1365, 0
    %v1409 = vsel %vm1063, %v1366, 0
    %v1412 = vsel %vm1063, %v1367, 0
    %v1415 = vsel %vm1063, %v1368, 0
    %1417 = vmatprep.subr.mxu0 0.0
    %1418 = vmatpush1.msra.mxu0 %v1055
    %1419 = vmatprep.subr.mxu0 0.0
    %1420 = vmatpush1.msra.mxu0 %v1056
    %1421 = vmatprep.subr.mxu0 0.0
    %1422 = vmatpush1.msra.mxu0 %v1057
    %1423 = vmatprep.subr.mxu0 0.0
    %1424 = vmatpush1.msra.mxu0 %v1058
    %1425 = vmatprep.subr.mxu0 0.0
    %1426 = vmatpush1.msra.mxu0 %v1059
    %1427 = vmatprep.subr.mxu0 0.0
    %1428 = vmatpush1.msra.mxu0 %v1060
    %1429 = vmatprep.subr.mxu0 0.0
    %1430 = vmatpush1.msra.mxu0 %v1061
    %1431 = vmatprep.subr.mxu0 0.0
    %1432 = vmatpush1.msra.mxu0 %v1062
    %1433 = vmatprep.subr.mxu0 0.0
    %1434 = vmatpush1.msra.mxu0 0.0
    %1435 = vmatprep.subr.mxu0 0.0
    %1436 = vmatpush1.msra.mxu0 0.0
    %1437 = vmatprep.subr.mxu0 0.0
    %1438 = vmatpush1.msra.mxu0 0.0
    %1439 = vmatprep.subr.mxu0 0.0
    %1440 = vmatpush1.msra.mxu0 0.0
    %1441 = vmatprep.subr.mxu0 0.0
    %1442 = vmatpush1.msra.mxu0 0.0
    %1443 = vmatprep.subr.mxu0 0.0
    %1444 = vmatpush1.msra.mxu0 0.0
    %1445 = vmatprep.subr.mxu0 0.0
    %1446 = vmatpush1.msra.mxu0 0.0
    %1447 = vmatprep.subr.mxu0 0.0
    %1448 = vmatpush1.msra.mxu0 0.0
    %1449 = vmatprep.subr.mxu0 0.0
    %1450 = vmatpush1.msra.mxu0 0.0
    %1451 = vmatprep.subr.mxu0 0.0
    %1452 = vmatpush1.msra.mxu0 0.0
    %1453 = vmatprep.subr.mxu0 0.0
    %1454 = vmatpush1.msra.mxu0 0.0
    %1455 = vmatprep.subr.mxu0 0.0
    %1456 = vmatpush1.msra.mxu0 0.0
    %1457 = vmatprep.subr.mxu0 0.0
    %1458 = vmatpush1.msra.mxu0 0.0
    %1459 = vmatprep.subr.mxu0 0.0
    %1460 = vmatpush1.msra.mxu0 0.0
    %1461 = vmatprep.subr.mxu0 0.0
    %1462 = vmatpush1.msra.mxu0 0.0
    %1463 = vmatprep.subr.mxu0 0.0
    %1464 = vmatpush1.msra.mxu0 0.0
    %1465 = vmatprep.subr.mxu0 0.0
    %1466 = vmatpush1.msra.mxu0 0.0
    %1467 = vmatprep.subr.mxu0 0.0
    %1468 = vmatpush1.msra.mxu0 0.0
    %1469 = vmatprep.subr.mxu0 0.0
    %1470 = vmatpush1.msra.mxu0 0.0
    %1471 = vmatprep.subr.mxu0 0.0
    %1472 = vmatpush1.msra.mxu0 0.0
    %1473 = vmatprep.subr.mxu0 0.0
    %1474 = vmatpush1.msra.mxu0 0.0
    %1475 = vmatprep.subr.mxu0 0.0
    %1476 = vmatpush1.msra.mxu0 0.0
    %1477 = vmatprep.subr.mxu0 0.0
    %1478 = vmatpush1.msra.mxu0 0.0
    %1479 = vmatprep.subr.mxu0 0.0
    %1480 = vmatpush1.msra.mxu0 0.0
    %1481 = vmatprep.mubr.f32.mxu0 0.0
    %1482 = vmatmul.mubr.f32.gmra.mrb[0].mxu0 %v1370
    %v1483 = vpop.f32.mrb[0].mxu0
    %v1484 = vadd.f32 0.0, %v1483
    %v1485 = vpop.f32.mrb[0].mxu0
    %1486 = vmatprep.mubr.f32.mxu0 0.0
    %1487 = vmatmul.mubr.f32.gmra.mrb[0].mxu0 %v1373
    %v1488 = vpop.f32.mrb[0].mxu0
    %v1489 = vadd.f32 0.0, %v1488
    %v1490 = vpop.f32.mrb[0].mxu0
    %1491 = vmatprep.mubr.f32.mxu0 0.0
    %1492 = vmatmul.mubr.f32.gmra.mrb[0].mxu0 %v1376
    %v1493 = vpop.f32.mrb[0].mxu0
    %v1494 = vadd.f32 0.0, %v1493
    %v1495 = vpop.f32.mrb[0].mxu0
    %1496 = vmatprep.mubr.f32.mxu0 0.0
    %1497 = vmatmul.mubr.f32.gmra.mrb[0].mxu0 %v1379
    %v1498 = vpop.f32.mrb[0].mxu0
    %v1499 = vadd.f32 0.0, %v1498
    %v1500 = vpop.f32.mrb[0].mxu0
    %1501 = vmatprep.mubr.f32.mxu0 0.0
    %1502 = vmatmul.mubr.f32.gmra.mrb[0].mxu0 %v1382
    %v1503 = vpop.f32.mrb[0].mxu0
    %v1504 = vadd.f32 0.0, %v1503
    %v1505 = vpop.f32.mrb[0].mxu0
    %1506 = vmatprep.mubr.f32.mxu0 0.0
    %1507 = vmatmul.mubr.f32.gmra.mrb[0].mxu0 %v1385
    %v1508 = vpop.f32.mrb[0].mxu0
    %v1509 = vadd.f32 0.0, %v1508
    %v1510 = vpop.f32.mrb[0].mxu0
    %1511 = vmatprep.mubr.f32.mxu0 0.0
    %1512 = vmatmul.mubr.f32.gmra.mrb[0].mxu0 %v1388
    %v1513 = vpop.f32.mrb[0].mxu0
    %v1514 = vadd.f32 0.0, %v1513
    %v1515 = vpop.f32.mrb[0].mxu0
    %1516 = vmatprep.mubr.f32.mxu0 0.0
    %1517 = vmatmul.mubr.f32.gmra.mrb[0].mxu0 %v1391
    %v1518 = vpop.f32.mrb[0].mxu0
    %v1519 = vadd.f32 0.0, %v1518
    %v1520 = vpop.f32.mrb[0].mxu0
    %1521 = vmatprep.mubr.f32.mxu0 0.0
    %1522 = vmatmul.mubr.f32.gmra.mrb[0].mxu0 %v1394
    %v1523 = vpop.f32.mrb[0].mxu0
    %v1524 = vadd.f32 0.0, %v1523
    %v1525 = vpop.f32.mrb[0].mxu0
    %1526 = vmatprep.mubr.f32.mxu0 0.0
    %1527 = vmatmul.mubr.f32.gmra.mrb[0].mxu0 %v1397
    %v1528 = vpop.f32.mrb[0].mxu0
    %v1529 = vadd.f32 0.0, %v1528
    %v1530 = vpop.f32.mrb[0].mxu0
    %1531 = vmatprep.mubr.f32.mxu0 0.0
    %1532 = vmatmul.mubr.f32.gmra.mrb[0].mxu0 %v1400
    %v1533 = vpop.f32.mrb[0].mxu0
    %v1534 = vadd.f32 0.0, %v1533
    %v1535 = vpop.f32.mrb[0].mxu0
    %1536 = vmatprep.mubr.f32.mxu0 0.0
    %1537 = vmatmul.mubr.f32.gmra.mrb[0].mxu0 %v1403
    %v1538 = vpop.f32.mrb[0].mxu0
    %v1539 = vadd.f32 0.0, %v1538
    %v1540 = vpop.f32.mrb[0].mxu0
    %1541 = vmatprep.mubr.f32.mxu0 0.0
    %1542 = vmatmul.mubr.f32.gmra.mrb[0].mxu0 %v1406
    %v1543 = vpop.f32.mrb[0].mxu0
    %v1544 = vadd.f32 0.0, %v1543
    %v1545 = vpop.f32.mrb[0].mxu0
    %1546 = vmatprep.mubr.f32.mxu0 0.0
    %1547 = vmatmul.mubr.f32.gmra.mrb[0].mxu0 %v1409
    %v1548 = vpop.f32.mrb[0].mxu0
    %v1549 = vadd.f32 0.0, %v1548
    %v1550 = vpop.f32.mrb[0].mxu0
    %1551 = vmatprep.mubr.f32.mxu0 0.0
    %1552 = vmatmul.mubr.f32.gmra.mrb[0].mxu0 %v1412
    %v1553 = vpop.f32.mrb[0].mxu0
    %v1554 = vadd.f32 0.0, %v1553
    %v1555 = vpop.f32.mrb[0].mxu0
    %1556 = vmatprep.mubr.f32.mxu0 0.0
    %1557 = vmatmul.mubr.f32.gmra.mrb[0].mxu0 %v1415
    %v1558 = vpop.f32.mrb[0].mxu0
    %v1559 = vadd.f32 0.0, %v1558
    %v1560 = vpop.f32.mrb[0].mxu0
    %1561 = vdwg.mxu0
    %v1562 = vadd.f32 %v1484, 1e-05
    %v1563 = vadd.f32 %v1489, 1e-05
    %v1564 = vadd.f32 %v1494, 1e-05
    %v1565 = vadd.f32 %v1499, 1e-05
    %v1566 = vadd.f32 %v1504, 1e-05
    %v1567 = vadd.f32 %v1509, 1e-05
    %v1568 = vadd.f32 %v1514, 1e-05
    %v1569 = vadd.f32 %v1519, 1e-05
    %v1570 = vadd.f32 %v1524, 1e-05
    %v1571 = vadd.f32 %v1529, 1e-05
    %v1572 = vadd.f32 %v1534, 1e-05
    %v1573 = vadd.f32 %v1539, 1e-05
    %v1574 = vadd.f32 %v1544, 1e-05
    %v1575 = vadd.f32 %v1549, 1e-05
    %v1576 = vadd.f32 %v1554, 1e-05
    %v1577 = vadd.f32 %v1559, 1e-05
    %v1578 = vrsqrt.pop %v1562
    %v1579 = vrsqrt.pop %v1563
    %v1580 = vrsqrt.pop %v1564
    %v1581 = vrsqrt.pop %v1565
    %v1582 = vrsqrt.pop %v1566
    %v1583 = vrsqrt.pop %v1567
    %v1584 = vrsqrt.pop %v1568
    %v1585 = vrsqrt.pop %v1569
    %v1586 = vrsqrt.pop %v1570
    %v1587 = vrsqrt.pop %v1571
    %v1588 = vrsqrt.pop %v1572
    %v1589 = vrsqrt.pop %v1573
    %v1590 = vrsqrt.pop %v1574
    %v1591 = vrsqrt.pop %v1575
    %v1592 = vrsqrt.pop %v1576
    %v1593 = vrsqrt.pop %v1577
    %1595 = vset.pattern.permute.xlu0 0
    %1596 = vperm.xlu0 %1595, %v1578
    %v1597 = vpop.permute.xlu0 %1596
    %1600 = vset.pattern.permute.xlu0 0
    %1601 = vperm.xlu0 %1600, %v1579
    %v1602 = vpop.permute.xlu0 %1601
    %1605 = vset.pattern.permute.xlu0 0
    %1606 = vperm.xlu0 %1605, %v1580
    %v1607 = vpop.permute.xlu0 %1606
    %1610 = vset.pattern.permute.xlu0 0
    %1611 = vperm.xlu0 %1610, %v1581
    %v1612 = vpop.permute.xlu0 %1611
    %1615 = vset.pattern.permute.xlu0 0
    %1616 = vperm.xlu0 %1615, %v1582
    %v1617 = vpop.permute.xlu0 %1616
    %1620 = vset.pattern.permute.xlu0 0
    %1621 = vperm.xlu0 %1620, %v1583
    %v1622 = vpop.permute.xlu0 %1621
    %1625 = vset.pattern.permute.xlu0 0
    %1626 = vperm.xlu0 %1625, %v1584
    %v1627 = vpop.permute.xlu0 %1626
    %1630 = vset.pattern.permute.xlu0 0
    %1631 = vperm.xlu0 %1630, %v1585
    %v1632 = vpop.permute.xlu0 %1631
    %1635 = vset.pattern.permute.xlu0 0
    %1636 = vperm.xlu0 %1635, %v1586
    %v1637 = vpop.permute.xlu0 %1636
    %1640 = vset.pattern.permute.xlu0 0
    %1641 = vperm.xlu0 %1640, %v1587
    %v1642 = vpop.permute.xlu0 %1641
    %1645 = vset.pattern.permute.xlu0 0
    %1646 = vperm.xlu0 %1645, %v1588
    %v1647 = vpop.permute.xlu0 %1646
    %1650 = vset.pattern.permute.xlu0 0
    %1651 = vperm.xlu0 %1650, %v1589
    %v1652 = vpop.permute.xlu0 %1651
    %1655 = vset.pattern.permute.xlu0 0
    %1656 = vperm.xlu0 %1655, %v1590
    %v1657 = vpop.permute.xlu0 %1656
    %1660 = vset.pattern.permute.xlu0 0
    %1661 = vperm.xlu0 %1660, %v1591
    %v1662 = vpop.permute.xlu0 %1661
    %1665 = vset.pattern.permute.xlu0 0
    %1666 = vperm.xlu0 %1665, %v1592
    %v1667 = vpop.permute.xlu0 %1666
    %1670 = vset.pattern.permute.xlu0 0
    %1671 = vperm.xlu0 %1670, %v1593
    %v1672 = vpop.permute.xlu0 %1671
    %v1674 = vmul.f32 %v1337, %v1597
    %v1675 = vmul.f32 %v1338, %v1602
    %v1676 = vmul.f32 %v1339, %v1607
    %v1677 = vmul.f32 %v1340, %v1612
    %v1678 = vmul.f32 %v1341, %v1617
    %v1679 = vmul.f32 %v1342, %v1622
    %v1680 = vmul.f32 %v1343, %v1627
    %v1681 = vmul.f32 %v1344, %v1632
    %v1682 = vmul.f32 %v1345, %v1637
    %v1683 = vmul.f32 %v1346, %v1642
    %v1684 = vmul.f32 %v1347, %v1647
    %v1685 = vmul.f32 %v1348, %v1652
    %v1686 = vmul.f32 %v1349, %v1657
    %v1687 = vmul.f32 %v1350, %v1662
    %v1688 = vmul.f32 %v1351, %v1667
    %v1689 = vmul.f32 %v1352, %v1672
    %v1691 = vlaneseq
    %v1692 = vshrl.u32 %v1691, 7
    %v1693 = vsub.s32 0, %v1692
    %v1694 = vrot.slane %v1053, %v1693
    %v1696 = vmul.f32 %v1674, %v1694
    %v1697 = vmul.f32 %v1675, %v1694
    %v1698 = vmul.f32 %v1676, %v1694
    %v1699 = vmul.f32 %v1677, %v1694
    %v1700 = vmul.f32 %v1678, %v1694
    %v1701 = vmul.f32 %v1679, %v1694
    %v1702 = vmul.f32 %v1680, %v1694
    %v1703 = vmul.f32 %v1681, %v1694
    %v1704 = vmul.f32 %v1682, %v1694
    %v1705 = vmul.f32 %v1683, %v1694
    %v1706 = vmul.f32 %v1684, %v1694
    %v1707 = vmul.f32 %v1685, %v1694
    %v1708 = vmul.f32 %v1686, %v1694
    %v1709 = vmul.f32 %v1687, %v1694
    %v1710 = vmul.f32 %v1688, %v1694
    %v1711 = vmul.f32 %v1689, %v1694
    %v1713 = vlaneseq
    %v1714 = vshrl.u32 %v1713, 7
    %v1715 = vsub.s32 0, %v1714
    %v1716 = vrot.slane %v1054, %v1715
    %v1718 = vadd.f32 %v1696, %v1716
    %v1719 = vadd.f32 %v1697, %v1716
    %v1720 = vadd.f32 %v1698, %v1716
    %v1721 = vadd.f32 %v1699, %v1716
    %v1722 = vadd.f32 %v1700, %v1716
    %v1723 = vadd.f32 %v1701, %v1716
    %v1724 = vadd.f32 %v1702, %v1716
    %v1725 = vadd.f32 %v1703, %v1716
    %v1726 = vadd.f32 %v1704, %v1716
    %v1727 = vadd.f32 %v1705, %v1716
    %v1728 = vadd.f32 %v1706, %v1716
    %v1729 = vadd.f32 %v1707, %v1716
    %v1730 = vadd.f32 %v1708, %v1716
    %v1731 = vadd.f32 %v1709, %v1716
    %v1732 = vadd.f32 %v1710, %v1716
    %v1733 = vadd.f32 %v1711, %v1716
    %v1734 = vld [vmem:[%s11] sm:$0xff]
    %v1735 = vld [vmem:[%s12] sm:$0xff]
    %1737 = vset.pattern.permute.xlu0 0
    %1738 = vperm.xlu0 %1737, %v1735
    %v1739 = vpop.permute.xlu0 %1738
    %v1742 = vsel %vm1063, %v1734, 0
    %v1745 = vsel %vm1063, %v1718, 0
    %v1748 = vsel %vm1063, %v1719, 0
    %v1751 = vsel %vm1063, %v1720, 0
    %v1754 = vsel %vm1063, %v1721, 0
    %v1757 = vsel %vm1063, %v1722, 0
    %v1760 = vsel %vm1063, %v1723, 0
    %v1763 = vsel %vm1063, %v1724, 0
    %v1766 = vsel %vm1063, %v1725, 0
    %v1769 = vsel %vm1063, %v1726, 0
    %v1772 = vsel %vm1063, %v1727, 0
    %v1775 = vsel %vm1063, %v1728, 0
    %v1778 = vsel %vm1063, %v1729, 0
    %v1781 = vsel %vm1063, %v1730, 0
    %v1784 = vsel %vm1063, %v1731, 0
    %v1787 = vsel %vm1063, %v1732, 0
    %v1790 = vsel %vm1063, %v1733, 0
    %1792 = vmatprep.subr.mxu0 0.0
    %1793 = vmatpush1.xpose.msra.mxu0 %v1745
    %1794 = vmatprep.subr.mxu0 0.0
    %1795 = vmatpush1.xpose.msra.mxu0 %v1748
    %1796 = vmatprep.subr.mxu0 0.0
    %1797 = vmatpush1.xpose.msra.mxu0 %v1751
    %1798 = vmatprep.subr.mxu0 0.0
    %1799 = vmatpush1.xpose.msra.mxu0 %v1754
    %1800 = vmatprep.subr.mxu0 0.0
    %1801 = vmatpush1.xpose.msra.mxu0 %v1757
    %1802 = vmatprep.subr.mxu0 0.0
    %1803 = vmatpush1.xpose.msra.mxu0 %v1760
    %1804 = vmatprep.subr.mxu0 0.0
    %1805 = vmatpush1.xpose.msra.mxu0 %v1763
    %1806 = vmatprep.subr.mxu0 0.0
    %1807 = vmatpush1.xpose.msra.mxu0 %v1766
    %1808 = vmatprep.subr.mxu0 0.0
    %1809 = vmatpush1.xpose.msra.mxu0 %v1769
    %1810 = vmatprep.subr.mxu0 0.0
    %1811 = vmatpush1.xpose.msra.mxu0 %v1772
    %1812 = vmatprep.subr.mxu0 0.0
    %1813 = vmatpush1.xpose.msra.mxu0 %v1775
    %1814 = vmatprep.subr.mxu0 0.0
    %1815 = vmatpush1.xpose.msra.mxu0 %v1778
    %1816 = vmatprep.subr.mxu0 0.0
    %1817 = vmatpush1.xpose.msra.mxu0 %v1781
    %1818 = vmatprep.subr.mxu0 0.0
    %1819 = vmatpush1.xpose.msra.mxu0 %v1784
    %1820 = vmatprep.subr.mxu0 0.0
    %1821 = vmatpush1.xpose.msra.mxu0 %v1787
    %1822 = vmatprep.subr.mxu0 0.0
    %1823 = vmatpush1.xpose.msra.mxu0 %v1790
    %1824 = vmatprep.subr.mxu0 0.0
    %1825 = vmatpush1.xpose.msra.mxu0 0.0
    %1826 = vmatprep.subr.mxu0 0.0
    %1827 = vmatpush1.xpose.msra.mxu0 0.0
    %1828 = vmatprep.subr.mxu0 0.0
    %1829 = vmatpush1.xpose.msra.mxu0 0.0
    %1830 = vmatprep.subr.mxu0 0.0
    %1831 = vmatpush1.xpose.msra.mxu0 0.0
    %1832 = vmatprep.subr.mxu0 0.0
    %1833 = vmatpush1.xpose.msra.mxu0 0.0
    %1834 = vmatprep.subr.mxu0 0.0
    %1835 = vmatpush1.xpose.msra.mxu0 0.0
    %1836 = vmatprep.subr.mxu0 0.0
    %1837 = vmatpush1.xpose.msra.mxu0 0.0
    %1838 = vmatprep.subr.mxu0 0.0
    %1839 = vmatpush1.xpose.msra.mxu0 0.0
    %1840 = vmatprep.subr.mxu0 0.0
    %1841 = vmatpush1.xpose.msra.mxu0 0.0
    %1842 = vmatprep.subr.mxu0 0.0
    %1843 = vmatpush1.xpose.msra.mxu0 0.0
    %1844 = vmatprep.subr.mxu0 0.0
    %1845 = vmatpush1.xpose.msra.mxu0 0.0
    %1846 = vmatprep.subr.mxu0 0.0
    %1847 = vmatpush1.xpose.msra.mxu0 0.0
    %1848 = vmatprep.subr.mxu0 0.0
    %1849 = vmatpush1.xpose.msra.mxu0 0.0
    %1850 = vmatprep.subr.mxu0 0.0
    %1851 = vmatpush1.xpose.msra.mxu0 0.0
    %1852 = vmatprep.subr.mxu0 0.0
    %1853 = vmatpush1.xpose.msra.mxu0 0.0
    %1854 = vmatprep.subr.mxu0 0.0
    %1855 = vmatpush1.xpose.msra.mxu0 0.0
    %1856 = vmatprep.mubr.f32.mxu0 0.0
    %1857 = vmatmul.mubr.f32.gmra.mrb[0].mxu0 %v1742
    %v1858 = vpop.f32.mrb[0].mxu0
    %v1859 = vadd.f32 %v1739, %v1858
    %v1860 = vpop.f32.mrb[0].mxu0
    %1861 = vdwg.mxu0
    %1862 = vst [vmem:[#allocation2] sm:$0xff] %v1859
    // Predicated region
    $region54: #{tpu_custom_call.1} parent=1 // pred_check
      _
    $region55: #{tpu_custom_call.1} parent=1 // pred_check_branch
      %1864 = sbr.rel (0) target = $region57
    $region56: #{tpu_custom_call.1} parent=1 // pred_region
      %s1866 = ssub.s32 128, 128
      %1867 = vsyncadd [#allocation3], %s1866
      %s1869 = sshll.u32 [#allocation2], 4
      %s1870 = int_to_ptr.vmem [resolvable:$true] %s1869
      %1872 = dma.vmem_to_hbm [thread:$0]  %s1870, 128, %s13, [#allocation3]
    $region57: #{tpu_custom_call.1} parent=1 // pred_fallthru
      _
    // Predicated region
    $region58: #{tpu_custom_call.1} parent=1 // pred_check
      _
    $region59: #{tpu_custom_call.1} parent=1 // pred_check_branch
      %1874 = sbr.rel (0) target = $region61
    $region60: #{tpu_custom_call.1} parent=1 // pred_region
      %1875 = dma.done [#allocation3], 128
    $region61: #{tpu_custom_call.1} parent=1 // pred_fallthru
      _
    %1876 = vsyncpa [#allocation3], 1

</llo_original>
